<compile_context>
chip_gen: v7x
topology: tpu7x:2x2x1
jax: 0.10.0
libtpu: 0.0.40
codegen_flags: <defaults>
</compile_context>

<pallas_src>
import functools

import jax
import jax.numpy as jnp
from jax.experimental import pallas as pl
from jax.experimental.pallas import tpu as pltpu

BN_EPS = 1e-5
LANE = 128


# --------------------------------------------------------------------------
# In-kernel helpers
# --------------------------------------------------------------------------
def _lane_mask(lp, n_len):
    """(1, Lp) lane iota and {0,1} float mask of the real (unpadded) lanes."""
    lane = jax.lax.broadcasted_iota(jnp.int32, (1, lp), 1)
    return lane, (lane < n_len).astype(jnp.float32)


def _channel_stats(h, mask, n_len):
    """Per-channel (mean, M2) over the real lanes of one batch -> (C, 2).

    h is f32 with zeros in padded lanes; mask keeps padded lanes out of the
    squared-deviation sum (Chan-style partials; avoids sum/sum_sq cancellation).
    """
    mean = jnp.sum(h, axis=-1, keepdims=True) * (1.0 / n_len)          # (C, 1)
    m2 = jnp.sum(mask * jnp.square(h - mean), axis=-1, keepdims=True)  # (C, 1)
    return jnp.concatenate([mean, m2], axis=-1)                        # (C, 2)


def _fold_bn(st, gamma, beta, rows_per_unit, count):
    """Combine per-batch (mean, M2) partials into BN (scale, bias) columns (C,1)."""
    mean_i = st[:, :, 0:1]                          # (N, C, 1)
    m2_i = st[:, :, 1:2]                            # (N, C, 1)
    mean = jnp.mean(mean_i, axis=0)                 # (C, 1)
    m2 = (jnp.sum(m2_i, axis=0)
          + rows_per_unit * jnp.sum(jnp.square(mean_i - mean), axis=0))
    var = m2 * (1.0 / count)                        # biased variance (training BN)
    scale = gamma * jax.lax.rsqrt(var + BN_EPS)
    bias = beta - mean * scale
    return scale, bias


# --------------------------------------------------------------------------
# Kernels (grid over batch tiles; each step handles B batches in NCL layout).
# --------------------------------------------------------------------------
def _stage1_kernel(x_ref, w1_ref, h1_ref, st1_ref, *, n_len):
    """conv1 (1x1): W1 (P,Cin) @ x_b (Cin,Lp) per batch; emit BN1 partial stats."""
    lp = x_ref.shape[2]
    _, mask = _lane_mask(lp, n_len)
    w1 = w1_ref[...]
    for b in range(x_ref.shape[0]):
        h = jnp.dot(w1, x_ref[b].astype(w1.dtype),
                    preferred_element_type=jnp.float32)              # (P, Lp)
        st1_ref[b] = _channel_stats(h, mask, n_len)
        h1_ref[b] = h.astype(h1_ref.dtype)


def _stage2_kernel(h1_ref, st1_ref, g1_ref, b1_ref, w2_ref, h2_ref, st2_ref,
                   *, n_len, rows_per_unit, count):
    """BN1 + ReLU + conv2 (k=3, pad=1) as three accumulating MXU dots; BN2 stats."""
    lp = h1_ref.shape[2]
    lane, mask = _lane_mask(lp, n_len)
    sc, bi = _fold_bn(st1_ref[...], g1_ref[...], b1_ref[...], rows_per_unit, count)
    w_m1, w_0, w_p1 = w2_ref[0], w2_ref[1], w2_ref[2]   # taps for a[l-1], a[l], a[l+1]
    md = w_0.dtype
    for b in range(h1_ref.shape[0]):
        a = jnp.maximum(h1_ref[b].astype(jnp.float32) * sc + bi, 0.0) * mask
        # a[l-1] / a[l+1] via XLU lane roll; zero the conv-padding edge lanes.
        a_m1 = jnp.where(lane == 0, 0.0, pltpu.roll(a, shift=1, axis=1))
        a_p1 = jnp.where(lane == n_len - 1, 0.0, pltpu.roll(a, shift=lp - 1, axis=1))
        h = (jnp.dot(w_m1, a_m1.astype(md), preferred_element_type=jnp.float32)
             + jnp.dot(w_0, a.astype(md), preferred_element_type=jnp.float32)
             + jnp.dot(w_p1, a_p1.astype(md), preferred_element_type=jnp.float32))
        h = h * mask   # shifted taps leak real values into padded lanes; zero them
        st2_ref[b] = _channel_stats(h, mask, n_len)
        h2_ref[b] = h.astype(h2_ref.dtype)


def _stage3_kernel(h2_ref, st2_ref, g2_ref, b2_ref, w3_ref, h3_ref, st3_ref,
                   *, n_len, rows_per_unit, count):
    """BN2 + ReLU + conv3 (1x1); emit BN3 partial stats."""
    lp = h2_ref.shape[2]
    _, mask = _lane_mask(lp, n_len)
    sc, bi = _fold_bn(st2_ref[...], g2_ref[...], b2_ref[...], rows_per_unit, count)
    w3 = w3_ref[...]
    for b in range(h2_ref.shape[0]):
        a = jnp.maximum(h2_ref[b].astype(jnp.float32) * sc + bi, 0.0) * mask
        h = jnp.dot(w3, a.astype(w3.dtype),
                    preferred_element_type=jnp.float32)              # (4P, Lp)
        st3_ref[b] = _channel_stats(h, mask, n_len)
        h3_ref[b] = h.astype(h3_ref.dtype)


def _stage4_kernel(h3_ref, st3_ref, g3_ref, b3_ref, x_ref, o_ref,
                   *, rows_per_unit, count):
    """BN3 + residual add + ReLU.  The residual x is only read here (NCL f32)."""
    sc, bi = _fold_bn(st3_ref[...], g3_ref[...], b3_ref[...], rows_per_unit, count)
    for b in range(h3_ref.shape[0]):
        o_ref[b] = jnp.maximum(
            h3_ref[b].astype(jnp.float32) * sc + bi + x_ref[b], 0.0)


# --------------------------------------------------------------------------
# Wrapper helpers.
# --------------------------------------------------------------------------
def _ceil_to(v, m):
    return -(-v // m) * m


def _pad_axis(a, axis, target):
    pad = target - a.shape[axis]
    if pad == 0:
        return a
    widths = [(0, 0)] * a.ndim
    widths[axis] = (0, pad)
    return jnp.pad(a, widths)


def _vmem_cap_bytes():
    try:
        return int(pltpu.get_tpu_info().vmem_capacity_bytes)
    except Exception:
        return 64 << 20        # conservative fallback (v7x per-core VMEM)


def _mosaic_params(need_bytes, cap):
    hi = max(cap - (4 << 20), 16 << 20)
    limit = int(min(max(need_bytes + (4 << 20), 16 << 20), hi))
    return pltpu.CompilerParams(dimension_semantics=("parallel",),
                                vmem_limit_bytes=limit)


def _choose_batch_tile(n, per_batch_bytes, budget):
    """Largest divisor of n (<=8) whose double-buffered tiles fit the budget and
    that keeps >= 2 grid steps when n >= 2 (so both v7x TensorCores get work)."""
    best = 1
    for d in range(1, min(n, 8) + 1):
        if n % d:
            continue
        if n >= 2 and n // d < 2:
            continue
        if 2 * d * per_batch_bytes <= budget:
            best = d
    return best


def _spec(shape, index_map, bufs=None):
    if bufs is not None:
        try:
            return pl.BlockSpec(shape, index_map, pipeline_mode=pl.Buffered(bufs))
        except Exception:      # older BlockSpec signature -> default pipelining
            pass
    return pl.BlockSpec(shape, index_map)


# --------------------------------------------------------------------------
# Forward: NCL-native pipeline, lane-padded length, 4 pipelined pallas_calls.
# --------------------------------------------------------------------------
def bottleneck_forward(x_ncl, w1_t, w2_t, w3_t, g1, b1, g2, b2, g3, b3,
                       matmul_dtype=jnp.bfloat16):
    N, Cin, L = x_ncl.shape
    P = w1_t.shape[0]
    Cout = w3_t.shape[0]
    assert Cin == Cout, "default Bottleneck (downsample=None) needs inplanes == 4*planes"

    f32 = jnp.float32
    md = jnp.dtype(matmul_dtype)
    ms = md.itemsize
    Lp = _ceil_to(L, LANE)          # pad length (lane axis) only; layout stays NCL
    count = float(N * L)
    rows = float(L)                 # rows per stats unit (one batch)

    # ---- weights: PyTorch (O, I, K) -> NCL matmul layouts (no activation transposes)
    W1 = w1_t[:, :, 0].astype(md)                        # (P, Cin)
    W2 = jnp.transpose(w2_t, (2, 0, 1)).astype(md)       # (3, P, P): taps [l-1, l, l+1]
    W3 = w3_t[:, :, 0].astype(md)                        # (4P, P)
    g1c, b1c = g1.reshape(P, 1).astype(f32), b1.reshape(P, 1).astype(f32)
    g2c, b2c = g2.reshape(P, 1).astype(f32), b2.reshape(P, 1).astype(f32)
    g3c, b3c = g3.reshape(Cout, 1).astype(f32), b3.reshape(Cout, 1).astype(f32)

    # ---- activation: zero-pad L to a lane multiple (no-op when already aligned)
    x = _pad_axis(x_ncl.astype(f32), 2, Lp)

    cap = _vmem_cap_bytes()
    per_batch = Lp * max(4 * Cin + ms * P,                    # stage 1
                         2 * ms * P + 16 * P,                 # stage 2 (+ f32 temps)
                         ms * P + ms * Cout + 4 * (P + Cout), # stage 3 (+ f32 temps)
                         ms * Cout + 4 * Cin + 4 * Cout)      # stage 4
    B = _choose_batch_tile(N, per_batch, budget=cap // 2)
    steps = N // B
    grid = (steps,)
    bufs4 = 3 if steps >= 3 else None     # deeper pipelining on DMA-dominated stage 4

    def act_spec(c, bufs=None):
        return _spec((B, c, Lp), lambda i: (i, 0, 0), bufs=bufs)

    def stat_spec(c):
        return pl.BlockSpec((B, c, 2), lambda i: (i, 0, 0))

    def full_spec(shape):
        zeros = (0,) * len(shape)
        return pl.BlockSpec(shape, lambda i: zeros)

    def act_shape(c, dtype):
        return jax.ShapeDtypeStruct((N, c, Lp), dtype)

    def stat_shape(c):
        return jax.ShapeDtypeStruct((N, c, 2), f32)

    blk = lambda c, item: B * c * Lp * item

    # ---- stage 1: conv1 (1x1) + BN1 partial stats ----------------------------
    h1, st1 = pl.pallas_call(
        functools.partial(_stage1_kernel, n_len=L),
        grid=grid,
        in_specs=[act_spec(Cin), full_spec((P, Cin))],
        out_specs=(act_spec(P), stat_spec(P)),
        out_shape=(act_shape(P, md), stat_shape(P)),
        compiler_params=_mosaic_params(
            2 * (blk(Cin, 4) + blk(P, ms)) + P * Cin * ms + 2 * blk(P, 4), cap),
        cost_estimate=pl.CostEstimate(
            flops=2 * N * Lp * Cin * P, transcendentals=0,
            bytes_accessed=4 * N * Cin * Lp + ms * N * P * Lp + ms * P * Cin),
    )(x, W1)

    # ---- stage 2: BN1 + ReLU + conv2 (k=3) as three accumulating dots --------
    h2, st2 = pl.pallas_call(
        functools.partial(_stage2_kernel, n_len=L, rows_per_unit=rows, count=count),
        grid=grid,
        in_specs=[act_spec(P), full_spec((N, P, 2)), full_spec((P, 1)),
                  full_spec((P, 1)), full_spec((3, P, P))],
        out_specs=(act_spec(P), stat_spec(P)),
        out_shape=(act_shape(P, md), stat_shape(P)),
        compiler_params=_mosaic_params(
            4 * blk(P, ms) + 3 * P * P * ms + 6 * blk(P, 4), cap),
        cost_estimate=pl.CostEstimate(
            flops=2 * N * Lp * 3 * P * P, transcendentals=0,
            bytes_accessed=2 * ms * N * P * Lp + 3 * ms * P * P),
    )(h1, st1, g1c, b1c, W2)

    # ---- stage 3: BN2 + ReLU + conv3 (1x1) + BN3 partial stats ----------------
    h3, st3 = pl.pallas_call(
        functools.partial(_stage3_kernel, n_len=L, rows_per_unit=rows, count=count),
        grid=grid,
        in_specs=[act_spec(P), full_spec((N, P, 2)), full_spec((P, 1)),
                  full_spec((P, 1)), full_spec((Cout, P))],
        out_specs=(act_spec(Cout), stat_spec(Cout)),
        out_shape=(act_shape(Cout, md), stat_shape(Cout)),
        compiler_params=_mosaic_params(
            2 * (blk(P, ms) + blk(Cout, ms)) + Cout * P * ms
            + 2 * (blk(P, 4) + blk(Cout, 4)), cap),
        cost_estimate=pl.CostEstimate(
            flops=2 * N * Lp * P * Cout, transcendentals=0,
            bytes_accessed=ms * N * (P + Cout) * Lp + ms * Cout * P),
    )(h2, st2, g2c, b2c, W3)

    # ---- stage 4: BN3 + residual add + ReLU ------------------------------------
    buf_mult = 3 if bufs4 else 2
    out = pl.pallas_call(
        functools.partial(_stage4_kernel, rows_per_unit=rows, count=count),
        grid=grid,
        in_specs=[act_spec(Cout, bufs=bufs4), full_spec((N, Cout, 2)),
                  full_spec((Cout, 1)), full_spec((Cout, 1)),
                  act_spec(Cin, bufs=bufs4)],
        out_specs=act_spec(Cout),
        out_shape=act_shape(Cout, f32),
        compiler_params=_mosaic_params(
            buf_mult * (blk(Cout, ms) + blk(Cin, 4)) + 2 * blk(Cout, 4), cap),
        cost_estimate=pl.CostEstimate(
            flops=4 * N * Lp * Cout, transcendentals=0,
            bytes_accessed=ms * N * Cout * Lp + 4 * N * (Cin + 2 * Cout) * Lp),
    )(h3, st3, g3c, b3c, x)

    # strip lane padding; result is already in PyTorch NCL layout (no transpose)
    return out[:, :, :L]


# --------------------------------------------------------------------------
# Pure-JAX reference (mirrors the PyTorch forward exactly, in NCL layout).
# --------------------------------------------------------------------------
def bottleneck_reference(x, w1_t, w2_t, w3_t, g1, b1, g2, b2, g3, b3):
    def conv1d(v, w, pad):
        return jax.lax.conv_general_dilated(
            v, w, window_strides=(1,), padding=[(pad, pad)],
            dimension_numbers=("NCH", "OIH", "NCH"))

    def bn(v, g, b):
        mean = jnp.mean(v, axis=(0, 2), keepdims=True)
        var = jnp.mean((v - mean) ** 2, axis=(0, 2), keepdims=True)
        return (v - mean) / jnp.sqrt(var + BN_EPS) * g[None, :, None] + b[None, :, None]

    out = jax.nn.relu(bn(conv1d(x, w1_t, 0), g1, b1))
    out = jax.nn.relu(bn(conv1d(out, w2_t, 1), g2, b2))
    out = bn(conv1d(out, w3_t, 0), g3, b3)
    return jax.nn.relu(out + x)


if __name__ == "__main__":
    key = jax.random.PRNGKey(0)
    ks = jax.random.split(key, 10)

    N, L = 2, 16
    planes = 8
    inplanes = planes * 4            # residual add needs inplanes == 4*planes

    x = jax.random.normal(ks[0], (N, inplanes, L), jnp.float32)
    # deterministic synthetic parameters (PyTorch weight layouts: (O, I, K))
    w1_t = 0.3 * jax.random.normal(ks[1], (planes, inplanes, 1), jnp.float32)
    w2_t = 0.3 * jax.random.normal(ks[2], (planes, planes, 3), jnp.float32)
    w3_t = 0.3 * jax.random.normal(ks[3], (planes * 4, planes, 1), jnp.float32)
    g1 = 1.0 + 0.1 * jax.random.normal(ks[4], (planes,), jnp.float32)
    b1 = 0.1 * jax.random.normal(ks[5], (planes,), jnp.float32)
    g2 = 1.0 + 0.1 * jax.random.normal(ks[6], (planes,), jnp.float32)
    b2 = 0.1 * jax.random.normal(ks[7], (planes,), jnp.float32)
    g3 = 1.0 + 0.1 * jax.random.normal(ks[8], (planes * 4,), jnp.float32)
    b3 = 0.1 * jax.random.normal(ks[9], (planes * 4,), jnp.float32)

    args = (x, w1_t, w2_t, w3_t, g1, b1, g2, b2, g3, b3)
    ref = bottleneck_reference(*args)

    fwd = jax.jit(bottleneck_forward, static_argnames=("matmul_dtype",))

    # Exactness check of the kernel pipeline (f32 matmuls, f32 intermediates).
    out_f32 = jax.block_until_ready(fwd(*args, matmul_dtype=jnp.float32))
    assert out_f32.shape == (N, planes * 4, L)
    err32 = float(jnp.max(jnp.abs(out_f32 - ref)))
    assert jnp.allclose(out_f32, ref, atol=2e-3, rtol=2e-3), (
        "f32 mismatch: max abs err = %e" % err32)

    # bf16 fast path (bf16 MXU + bf16 intermediate storage; BN/residual/ReLU f32).
    out_bf16 = jax.block_until_ready(fwd(*args, matmul_dtype=jnp.bfloat16))
    rel = float(jnp.linalg.norm(out_bf16.astype(jnp.float32) - ref)
                / (jnp.linalg.norm(ref) + 1e-12))
    assert rel < 2.5e-2, "bf16 relative L2 error too large: %e" % rel

    print("KERNEL_OK")
</pallas_src>

<mosaic_0001>
module attributes {stable_mosaic.version = 11 : i64} {
  func.func @_stage1_kernel(%arg0: i32, %arg1: memref<1x32x128xf32, #tpu.memory_space<vmem>>, %arg2: memref<8x32xf32, #tpu.memory_space<vmem>>, %arg3: memref<1x8x128xf32, #tpu.memory_space<vmem>>, %arg4: memref<1x8x2xf32, #tpu.memory_space<vmem>>) attributes {dimension_semantics = [#tpu.dimension_semantics<parallel>], iteration_bounds = array<i64: 2>, scalar_prefetch = 0 : i64, scratch_operands = 0 : i64, tpu.core_type = #tpu.core_type<tc>, window_params = [{transform_indices = @transform_0, window_bounds = array<i64: 1, 32, 128>}, {pipeline_mode = #tpu.pipeline_mode<synchronous>, transform_indices = @transform_1, window_bounds = array<i64: 8, 32>}, {transform_indices = @transform_2, window_bounds = array<i64: 1, 8, 128>}, {transform_indices = @transform_3, window_bounds = array<i64: 1, 8, 2>}]} {
    %0 = tpu.iota {dimensions = array<i32: 1>} : vector<1x128xi32>
    %c16_i32 = arith.constant 16 : i32
    %1 = vector.broadcast %c16_i32 : i32 to vector<1x128xi32>
    %2 = arith.cmpi slt, %0, %1 : vector<1x128xi32>
    %3 = arith.extui %2 : vector<1x128xi1> to vector<1x128xi32>
    %4 = arith.sitofp %3 : vector<1x128xi32> to vector<1x128xf32>
    %c0 = arith.constant 0 : index
    %c0_0 = arith.constant 0 : index
    %5 = vector.load %arg2[%c0, %c0_0] : memref<8x32xf32, #tpu.memory_space<vmem>>, vector<8x32xf32>
    %c0_1 = arith.constant 0 : index
    %c0_2 = arith.constant 0 : index
    %c0_3 = arith.constant 0 : index
    %6 = vector.load %arg1[%c0_1, %c0_2, %c0_3] : memref<1x32x128xf32, #tpu.memory_space<vmem>>, vector<1x32x128xf32>
    %7 = vector.shape_cast %6 : vector<1x32x128xf32> to vector<32x128xf32>
    %cst = arith.constant dense<0.000000e+00> : vector<8x128xf32>
    %8 = tpu.matmul %5, %7, %cst {dimension_numbers = #tpu.dot_dimension_numbers<[1], [0], [0], [1], [0, 0, 1, 1], [], []>} : vector<8x32xf32>, vector<32x128xf32>, vector<8x128xf32> -> vector<8x128xf32>
    %cst_4 = arith.constant dense<0.000000e+00> : vector<8xf32>
    %9 = vector.multi_reduction <add>, %8, %cst_4 [1] : vector<8x128xf32> to vector<8xf32>
    %10 = vector.shape_cast %9 : vector<8xf32> to vector<8x1xf32>
    %cst_5 = arith.constant 6.250000e-02 : f32
    %11 = vector.broadcast %cst_5 : f32 to vector<8x1xf32>
    %12 = arith.mulf %10, %11 : vector<8x1xf32>
    %13 = vector.broadcast %12 : vector<8x1xf32> to vector<8x128xf32>
    %14 = arith.subf %8, %13 : vector<8x128xf32>
    %15 = arith.mulf %14, %14 : vector<8x128xf32>
    %16 = vector.broadcast %4 : vector<1x128xf32> to vector<8x128xf32>
    %17 = arith.mulf %16, %15 : vector<8x128xf32>
    %cst_6 = arith.constant dense<0.000000e+00> : vector<8xf32>
    %18 = vector.multi_reduction <add>, %17, %cst_6 [1] : vector<8x128xf32> to vector<8xf32>
    %19 = vector.shape_cast %18 : vector<8xf32> to vector<8x1xf32>
    %20 = tpu.concatenate %12, %19 in 1 : vector<8x1xf32>, vector<8x1xf32> -> vector<8x2xf32>
    %c0_7 = arith.constant 0 : index
    %c0_8 = arith.constant 0 : index
    %c0_9 = arith.constant 0 : index
    %21 = vector.load %arg4[%c0_7, %c0_8, %c0_9] : memref<1x8x2xf32, #tpu.memory_space<vmem>>, vector<1x8x2xf32>
    %22 = vector.shape_cast %21 : vector<1x8x2xf32> to vector<8x2xf32>
    %23 = vector.shape_cast %20 : vector<8x2xf32> to vector<1x8x2xf32>
    tpu.vector_store %arg4[%c0_7, %c0_8, %c0_9], %23 {strides = array<i32>} : memref<1x8x2xf32, #tpu.memory_space<vmem>>, vector<1x8x2xf32>,
    %c0_10 = arith.constant 0 : index
    %c0_11 = arith.constant 0 : index
    %c0_12 = arith.constant 0 : index
    %24 = vector.load %arg3[%c0_10, %c0_11, %c0_12] : memref<1x8x128xf32, #tpu.memory_space<vmem>>, vector<1x8x128xf32>
    %25 = vector.shape_cast %24 : vector<1x8x128xf32> to vector<8x128xf32>
    %26 = vector.shape_cast %8 : vector<8x128xf32> to vector<1x8x128xf32>
    tpu.vector_store %arg3[%c0_10, %c0_11, %c0_12], %26 {strides = array<i32>} : memref<1x8x128xf32, #tpu.memory_space<vmem>>, vector<1x8x128xf32>,
    return
  }
  func.func @transform_0(%arg0: i32) -> (i32, i32, i32) {
    %c0_i32 = arith.constant 0 : i32
    %c0_i32_0 = arith.constant 0 : i32
    %c0_i32_1 = arith.constant 0 : i32
    return %arg0, %c0_i32, %c0_i32_0 : i32, i32, i32
  }
  func.func @transform_1(%arg0: i32) -> (i32, i32) {
    %c0_i32 = arith.constant 0 : i32
    %c0_i32_0 = arith.constant 0 : i32
    %c0_i32_1 = arith.constant 0 : i32
    return %c0_i32, %c0_i32_0 : i32, i32
  }
  func.func @transform_2(%arg0: i32) -> (i32, i32, i32) {
    %c0_i32 = arith.constant 0 : i32
    %c0_i32_0 = arith.constant 0 : i32
    %c0_i32_1 = arith.constant 0 : i32
    return %arg0, %c0_i32, %c0_i32_0 : i32, i32, i32
  }
  func.func @transform_3(%arg0: i32) -> (i32, i32, i32) {
    %c0_i32 = arith.constant 0 : i32
    %c0_i32_0 = arith.constant 0 : i32
    %c0_i32_1 = arith.constant 0 : i32
    return %arg0, %c0_i32, %c0_i32_0 : i32, i32, i32
  }
}

module attributes {stable_mosaic.version = 11 : i64} {
  func.func @_stage2_kernel(%arg0: i32, %arg1: memref<1x8x128xf32, #tpu.memory_space<vmem>>, %arg2: memref<2x8x2xf32, #tpu.memory_space<vmem>>, %arg3: memref<8x1xf32, #tpu.memory_space<vmem>>, %arg4: memref<8x1xf32, #tpu.memory_space<vmem>>, %arg5: memref<3x8x8xf32, #tpu.memory_space<vmem>>, %arg6: memref<1x8x128xf32, #tpu.memory_space<vmem>>, %arg7: memref<1x8x2xf32, #tpu.memory_space<vmem>>) attributes {dimension_semantics = [#tpu.dimension_semantics<parallel>], iteration_bounds = array<i64: 2>, scalar_prefetch = 0 : i64, scratch_operands = 0 : i64, tpu.core_type = #tpu.core_type<tc>, window_params = [{transform_indices = @transform_0, window_bounds = array<i64: 1, 8, 128>}, {pipeline_mode = #tpu.pipeline_mode<synchronous>, transform_indices = @transform_1, window_bounds = array<i64: 2, 8, 2>}, {pipeline_mode = #tpu.pipeline_mode<synchronous>, transform_indices = @transform_2, window_bounds = array<i64: 8, 1>}, {pipeline_mode = #tpu.pipeline_mode<synchronous>, transform_indices = @transform_3, window_bounds = array<i64: 8, 1>}, {pipeline_mode = #tpu.pipeline_mode<synchronous>, transform_indices = @transform_4, window_bounds = array<i64: 3, 8, 8>}, {transform_indices = @transform_5, window_bounds = array<i64: 1, 8, 128>}, {transform_indices = @transform_6, window_bounds = array<i64: 1, 8, 2>}]} {
    %0 = tpu.iota {dimensions = array<i32: 1>} : vector<1x128xi32>
    %c16_i32 = arith.constant 16 : i32
    %1 = vector.broadcast %c16_i32 : i32 to vector<1x128xi32>
    %2 = arith.cmpi slt, %0, %1 : vector<1x128xi32>
    %3 = arith.extui %2 : vector<1x128xi1> to vector<1x128xi32>
    %4 = arith.sitofp %3 : vector<1x128xi32> to vector<1x128xf32>
    %c0 = arith.constant 0 : index
    %c0_0 = arith.constant 0 : index
    %c0_1 = arith.constant 0 : index
    %5 = vector.load %arg2[%c0, %c0_0, %c0_1] : memref<2x8x2xf32, #tpu.memory_space<vmem>>, vector<2x8x2xf32>
    %c0_2 = arith.constant 0 : index
    %c0_3 = arith.constant 0 : index
    %6 = vector.load %arg3[%c0_2, %c0_3] : memref<8x1xf32, #tpu.memory_space<vmem>>, vector<8x1xf32>
    %c0_4 = arith.constant 0 : index
    %c0_5 = arith.constant 0 : index
    %7 = vector.load %arg4[%c0_4, %c0_5] : memref<8x1xf32, #tpu.memory_space<vmem>>, vector<8x1xf32>
    %8 = vector.extract_strided_slice %5 {offsets = [0, 0, 0], sizes = [2, 8, 1], strides = [1, 1, 1]} : vector<2x8x2xf32> to vector<2x8x1xf32>
    %9 = vector.extract_strided_slice %5 {offsets = [0, 0, 1], sizes = [2, 8, 1], strides = [1, 1, 1]} : vector<2x8x2xf32> to vector<2x8x1xf32>
    %cst = arith.constant dense<0.000000e+00> : vector<8x1xf32>
    %10 = vector.multi_reduction <add>, %8, %cst [0] : vector<2x8x1xf32> to vector<8x1xf32>
    %cst_6 = arith.constant 2.000000e+00 : f32
    %11 = vector.broadcast %cst_6 : f32 to vector<8x1xf32>
    %12 = arith.divf %10, %11 : vector<8x1xf32>
    %cst_7 = arith.constant dense<0.000000e+00> : vector<8x1xf32>
    %13 = vector.multi_reduction <add>, %9, %cst_7 [0] : vector<2x8x1xf32> to vector<8x1xf32>
    %14 = vector.shape_cast %12 : vector<8x1xf32> to vector<1x8x1xf32>
    %15 = vector.broadcast %14 : vector<1x8x1xf32> to vector<2x8x1xf32>
    %16 = arith.subf %8, %15 : vector<2x8x1xf32>
    %17 = arith.mulf %16, %16 : vector<2x8x1xf32>
    %cst_8 = arith.constant dense<0.000000e+00> : vector<8x1xf32>
    %18 = vector.multi_reduction <add>, %17, %cst_8 [0] : vector<2x8x1xf32> to vector<8x1xf32>
    %cst_9 = arith.constant 1.600000e+01 : f32
    %19 = vector.broadcast %cst_9 : f32 to vector<8x1xf32>
    %20 = arith.mulf %19, %18 : vector<8x1xf32>
    %21 = arith.addf %13, %20 : vector<8x1xf32>
    %cst_10 = arith.constant 3.125000e-02 : f32
    %22 = vector.broadcast %cst_10 : f32 to vector<8x1xf32>
    %23 = arith.mulf %21, %22 : vector<8x1xf32>
    %cst_11 = arith.constant 9.99999974E-6 : f32
    %24 = vector.broadcast %cst_11 : f32 to vector<8x1xf32>
    %25 = arith.addf %23, %24 : vector<8x1xf32>
    %26 = math.rsqrt %25 : vector<8x1xf32>
    %27 = arith.mulf %6, %26 : vector<8x1xf32>
    %28 = arith.mulf %12, %27 : vector<8x1xf32>
    %29 = arith.subf %7, %28 : vector<8x1xf32>
    %c0_12 = arith.constant 0 : index
    %c0_13 = arith.constant 0 : index
    %c0_14 = arith.constant 0 : index
    %30 = vector.load %arg5[%c0_12, %c0_13, %c0_14] : memref<3x8x8xf32, #tpu.memory_space<vmem>>, vector<1x8x8xf32>
    %31 = vector.shape_cast %30 : vector<1x8x8xf32> to vector<8x8xf32>
    %c1 = arith.constant 1 : index
    %c0_15 = arith.constant 0 : index
    %c0_16 = arith.constant 0 : index
    %32 = vector.load %arg5[%c1, %c0_15, %c0_16] : memref<3x8x8xf32, #tpu.memory_space<vmem>>, vector<1x8x8xf32>
    %33 = vector.shape_cast %32 : vector<1x8x8xf32> to vector<8x8xf32>
    %c2 = arith.constant 2 : index
    %c0_17 = arith.constant 0 : index
    %c0_18 = arith.constant 0 : index
    %34 = vector.load %arg5[%c2, %c0_17, %c0_18] : memref<3x8x8xf32, #tpu.memory_space<vmem>>, vector<1x8x8xf32>
    %35 = vector.shape_cast %34 : vector<1x8x8xf32> to vector<8x8xf32>
    %c0_19 = arith.constant 0 : index
    %c0_20 = arith.constant 0 : index
    %c0_21 = arith.constant 0 : index
    %36 = vector.load %arg1[%c0_19, %c0_20, %c0_21] : memref<1x8x128xf32, #tpu.memory_space<vmem>>, vector<1x8x128xf32>
    %37 = vector.shape_cast %36 : vector<1x8x128xf32> to vector<8x128xf32>
    %38 = vector.broadcast %27 : vector<8x1xf32> to vector<8x128xf32>
    %39 = arith.mulf %37, %38 : vector<8x128xf32>
    %40 = vector.broadcast %29 : vector<8x1xf32> to vector<8x128xf32>
    %41 = arith.addf %39, %40 : vector<8x128xf32>
    %cst_22 = arith.constant 0.000000e+00 : f32
    %42 = vector.broadcast %cst_22 : f32 to vector<8x128xf32>
    %43 = arith.maximumf %41, %42 : vector<8x128xf32>
    %44 = vector.broadcast %4 : vector<1x128xf32> to vector<8x128xf32>
    %45 = arith.mulf %43, %44 : vector<8x128xf32>
    %c0_i32 = arith.constant 0 : i32
    %46 = vector.broadcast %c0_i32 : i32 to vector<1x128xi32>
    %47 = arith.cmpi eq, %0, %46 : vector<1x128xi32>
    %c1_i32 = arith.constant 1 : i32
    %48 = tpu.dynamic_rotate %45 by %c1_i32 dim 1 : vector<8x128xf32>, i32 -> vector<8x128xf32>
    %cst_23 = arith.constant 0.000000e+00 : f32
    %49 = vector.shape_cast %47 : vector<1x128xi1> to vector<1x128xi1>
    %50 = vector.broadcast %49 : vector<1x128xi1> to vector<8x128xi1>
    %51 = vector.broadcast %cst_23 : f32 to vector<8x128xf32>
    %52 = arith.select %50, %51, %48 : vector<8x128xi1>, vector<8x128xf32>
    %c15_i32 = arith.constant 15 : i32
    %53 = vector.broadcast %c15_i32 : i32 to vector<1x128xi32>
    %54 = arith.cmpi eq, %0, %53 : vector<1x128xi32>
    %c127_i32 = arith.constant 127 : i32
    %55 = tpu.dynamic_rotate %45 by %c127_i32 dim 1 : vector<8x128xf32>, i32 -> vector<8x128xf32>
    %cst_24 = arith.constant 0.000000e+00 : f32
    %56 = vector.shape_cast %54 : vector<1x128xi1> to vector<1x128xi1>
    %57 = vector.broadcast %56 : vector<1x128xi1> to vector<8x128xi1>
    %58 = vector.broadcast %cst_24 : f32 to vector<8x128xf32>
    %59 = arith.select %57, %58, %55 : vector<8x128xi1>, vector<8x128xf32>
    %cst_25 = arith.constant dense<0.000000e+00> : vector<8x128xf32>
    %60 = tpu.matmul %31, %52, %cst_25 {dimension_numbers = #tpu.dot_dimension_numbers<[1], [0], [0], [1], [0, 0, 1, 1], [], []>} : vector<8x8xf32>, vector<8x128xf32>, vector<8x128xf32> -> vector<8x128xf32>
    %cst_26 = arith.constant dense<0.000000e+00> : vector<8x128xf32>
    %61 = tpu.matmul %33, %45, %cst_26 {dimension_numbers = #tpu.dot_dimension_numbers<[1], [0], [0], [1], [0, 0, 1, 1], [], []>} : vector<8x8xf32>, vector<8x128xf32>, vector<8x128xf32> -> vector<8x128xf32>
    %62 = arith.addf %60, %61 : vector<8x128xf32>
    %cst_27 = arith.constant dense<0.000000e+00> : vector<8x128xf32>
    %63 = tpu.matmul %35, %59, %cst_27 {dimension_numbers = #tpu.dot_dimension_numbers<[1], [0], [0], [1], [0, 0, 1, 1], [], []>} : vector<8x8xf32>, vector<8x128xf32>, vector<8x128xf32> -> vector<8x128xf32>
    %64 = arith.addf %62, %63 : vector<8x128xf32>
    %65 = vector.broadcast %4 : vector<1x128xf32> to vector<8x128xf32>
    %66 = arith.mulf %64, %65 : vector<8x128xf32>
    %cst_28 = arith.constant dense<0.000000e+00> : vector<8xf32>
    %67 = vector.multi_reduction <add>, %66, %cst_28 [1] : vector<8x128xf32> to vector<8xf32>
    %68 = vector.shape_cast %67 : vector<8xf32> to vector<8x1xf32>
    %cst_29 = arith.constant 6.250000e-02 : f32
    %69 = vector.broadcast %cst_29 : f32 to vector<8x1xf32>
    %70 = arith.mulf %68, %69 : vector<8x1xf32>
    %71 = vector.broadcast %70 : vector<8x1xf32> to vector<8x128xf32>
    %72 = arith.subf %66, %71 : vector<8x128xf32>
    %73 = arith.mulf %72, %72 : vector<8x128xf32>
    %74 = vector.broadcast %4 : vector<1x128xf32> to vector<8x128xf32>
    %75 = arith.mulf %74, %73 : vector<8x128xf32>
    %cst_30 = arith.constant dense<0.000000e+00> : vector<8xf32>
    %76 = vector.multi_reduction <add>, %75, %cst_30 [1] : vector<8x128xf32> to vector<8xf32>
    %77 = vector.shape_cast %76 : vector<8xf32> to vector<8x1xf32>
    %78 = tpu.concatenate %70, %77 in 1 : vector<8x1xf32>, vector<8x1xf32> -> vector<8x2xf32>
    %c0_31 = arith.constant 0 : index
    %c0_32 = arith.constant 0 : index
    %c0_33 = arith.constant 0 : index
    %79 = vector.load %arg7[%c0_31, %c0_32, %c0_33] : memref<1x8x2xf32, #tpu.memory_space<vmem>>, vector<1x8x2xf32>
    %80 = vector.shape_cast %79 : vector<1x8x2xf32> to vector<8x2xf32>
    %81 = vector.shape_cast %78 : vector<8x2xf32> to vector<1x8x2xf32>
    tpu.vector_store %arg7[%c0_31, %c0_32, %c0_33], %81 {strides = array<i32>} : memref<1x8x2xf32, #tpu.memory_space<vmem>>, vector<1x8x2xf32>,
    %c0_34 = arith.constant 0 : index
    %c0_35 = arith.constant 0 : index
    %c0_36 = arith.constant 0 : index
    %82 = vector.load %arg6[%c0_34, %c0_35, %c0_36] : memref<1x8x128xf32, #tpu.memory_space<vmem>>, vector<1x8x128xf32>
    %83 = vector.shape_cast %82 : vector<1x8x128xf32> to vector<8x128xf32>
    %84 = vector.shape_cast %66 : vector<8x128xf32> to vector<1x8x128xf32>
    tpu.vector_store %arg6[%c0_34, %c0_35, %c0_36], %84 {strides = array<i32>} : memref<1x8x128xf32, #tpu.memory_space<vmem>>, vector<1x8x128xf32>,
    return
  }
  func.func @transform_0(%arg0: i32) -> (i32, i32, i32) {
    %c0_i32 = arith.constant 0 : i32
    %c0_i32_0 = arith.constant 0 : i32
    %c0_i32_1 = arith.constant 0 : i32
    return %arg0, %c0_i32, %c0_i32_0 : i32, i32, i32
  }
  func.func @transform_1(%arg0: i32) -> (i32, i32, i32) {
    %c0_i32 = arith.constant 0 : i32
    %c0_i32_0 = arith.constant 0 : i32
    %c0_i32_1 = arith.constant 0 : i32
    %c0_i32_2 = arith.constant 0 : i32
    return %c0_i32, %c0_i32_0, %c0_i32_1 : i32, i32, i32
  }
  func.func @transform_2(%arg0: i32) -> (i32, i32) {
    %c0_i32 = arith.constant 0 : i32
    %c0_i32_0 = arith.constant 0 : i32
    %c0_i32_1 = arith.constant 0 : i32
    return %c0_i32, %c0_i32_0 : i32, i32
  }
  func.func @transform_3(%arg0: i32) -> (i32, i32) {
    %c0_i32 = arith.constant 0 : i32
    %c0_i32_0 = arith.constant 0 : i32
    %c0_i32_1 = arith.constant 0 : i32
    return %c0_i32, %c0_i32_0 : i32, i32
  }
  func.func @transform_4(%arg0: i32) -> (i32, i32, i32) {
    %c0_i32 = arith.constant 0 : i32
    %c0_i32_0 = arith.constant 0 : i32
    %c0_i32_1 = arith.constant 0 : i32
    %c0_i32_2 = arith.constant 0 : i32
    return %c0_i32, %c0_i32_0, %c0_i32_1 : i32, i32, i32
  }
  func.func @transform_5(%arg0: i32) -> (i32, i32, i32) {
    %c0_i32 = arith.constant 0 : i32
    %c0_i32_0 = arith.constant 0 : i32
    %c0_i32_1 = arith.constant 0 : i32
    return %arg0, %c0_i32, %c0_i32_0 : i32, i32, i32
  }
  func.func @transform_6(%arg0: i32) -> (i32, i32, i32) {
    %c0_i32 = arith.constant 0 : i32
    %c0_i32_0 = arith.constant 0 : i32
    %c0_i32_1 = arith.constant 0 : i32
    return %arg0, %c0_i32, %c0_i32_0 : i32, i32, i32
  }
}

module attributes {stable_mosaic.version = 11 : i64} {
  func.func @_stage3_kernel(%arg0: i32, %arg1: memref<1x8x128xf32, #tpu.memory_space<vmem>>, %arg2: memref<2x8x2xf32, #tpu.memory_space<vmem>>, %arg3: memref<8x1xf32, #tpu.memory_space<vmem>>, %arg4: memref<8x1xf32, #tpu.memory_space<vmem>>, %arg5: memref<32x8xf32, #tpu.memory_space<vmem>>, %arg6: memref<1x32x128xf32, #tpu.memory_space<vmem>>, %arg7: memref<1x32x2xf32, #tpu.memory_space<vmem>>) attributes {dimension_semantics = [#tpu.dimension_semantics<parallel>], iteration_bounds = array<i64: 2>, scalar_prefetch = 0 : i64, scratch_operands = 0 : i64, tpu.core_type = #tpu.core_type<tc>, window_params = [{transform_indices = @transform_0, window_bounds = array<i64: 1, 8, 128>}, {pipeline_mode = #tpu.pipeline_mode<synchronous>, transform_indices = @transform_1, window_bounds = array<i64: 2, 8, 2>}, {pipeline_mode = #tpu.pipeline_mode<synchronous>, transform_indices = @transform_2, window_bounds = array<i64: 8, 1>}, {pipeline_mode = #tpu.pipeline_mode<synchronous>, transform_indices = @transform_3, window_bounds = array<i64: 8, 1>}, {pipeline_mode = #tpu.pipeline_mode<synchronous>, transform_indices = @transform_4, window_bounds = array<i64: 32, 8>}, {transform_indices = @transform_5, window_bounds = array<i64: 1, 32, 128>}, {transform_indices = @transform_6, window_bounds = array<i64: 1, 32, 2>}]} {
    %0 = tpu.iota {dimensions = array<i32: 1>} : vector<1x128xi32>
    %c16_i32 = arith.constant 16 : i32
    %1 = vector.broadcast %c16_i32 : i32 to vector<1x128xi32>
    %2 = arith.cmpi slt, %0, %1 : vector<1x128xi32>
    %3 = arith.extui %2 : vector<1x128xi1> to vector<1x128xi32>
    %4 = arith.sitofp %3 : vector<1x128xi32> to vector<1x128xf32>
    %c0 = arith.constant 0 : index
    %c0_0 = arith.constant 0 : index
    %c0_1 = arith.constant 0 : index
    %5 = vector.load %arg2[%c0, %c0_0, %c0_1] : memref<2x8x2xf32, #tpu.memory_space<vmem>>, vector<2x8x2xf32>
    %c0_2 = arith.constant 0 : index
    %c0_3 = arith.constant 0 : index
    %6 = vector.load %arg3[%c0_2, %c0_3] : memref<8x1xf32, #tpu.memory_space<vmem>>, vector<8x1xf32>
    %c0_4 = arith.constant 0 : index
    %c0_5 = arith.constant 0 : index
    %7 = vector.load %arg4[%c0_4, %c0_5] : memref<8x1xf32, #tpu.memory_space<vmem>>, vector<8x1xf32>
    %8 = vector.extract_strided_slice %5 {offsets = [0, 0, 0], sizes = [2, 8, 1], strides = [1, 1, 1]} : vector<2x8x2xf32> to vector<2x8x1xf32>
    %9 = vector.extract_strided_slice %5 {offsets = [0, 0, 1], sizes = [2, 8, 1], strides = [1, 1, 1]} : vector<2x8x2xf32> to vector<2x8x1xf32>
    %cst = arith.constant dense<0.000000e+00> : vector<8x1xf32>
    %10 = vector.multi_reduction <add>, %8, %cst [0] : vector<2x8x1xf32> to vector<8x1xf32>
    %cst_6 = arith.constant 2.000000e+00 : f32
    %11 = vector.broadcast %cst_6 : f32 to vector<8x1xf32>
    %12 = arith.divf %10, %11 : vector<8x1xf32>
    %cst_7 = arith.constant dense<0.000000e+00> : vector<8x1xf32>
    %13 = vector.multi_reduction <add>, %9, %cst_7 [0] : vector<2x8x1xf32> to vector<8x1xf32>
    %14 = vector.shape_cast %12 : vector<8x1xf32> to vector<1x8x1xf32>
    %15 = vector.broadcast %14 : vector<1x8x1xf32> to vector<2x8x1xf32>
    %16 = arith.subf %8, %15 : vector<2x8x1xf32>
    %17 = arith.mulf %16, %16 : vector<2x8x1xf32>
    %cst_8 = arith.constant dense<0.000000e+00> : vector<8x1xf32>
    %18 = vector.multi_reduction <add>, %17, %cst_8 [0] : vector<2x8x1xf32> to vector<8x1xf32>
    %cst_9 = arith.constant 1.600000e+01 : f32
    %19 = vector.broadcast %cst_9 : f32 to vector<8x1xf32>
    %20 = arith.mulf %19, %18 : vector<8x1xf32>
    %21 = arith.addf %13, %20 : vector<8x1xf32>
    %cst_10 = arith.constant 3.125000e-02 : f32
    %22 = vector.broadcast %cst_10 : f32 to vector<8x1xf32>
    %23 = arith.mulf %21, %22 : vector<8x1xf32>
    %cst_11 = arith.constant 9.99999974E-6 : f32
    %24 = vector.broadcast %cst_11 : f32 to vector<8x1xf32>
    %25 = arith.addf %23, %24 : vector<8x1xf32>
    %26 = math.rsqrt %25 : vector<8x1xf32>
    %27 = arith.mulf %6, %26 : vector<8x1xf32>
    %28 = arith.mulf %12, %27 : vector<8x1xf32>
    %29 = arith.subf %7, %28 : vector<8x1xf32>
    %c0_12 = arith.constant 0 : index
    %c0_13 = arith.constant 0 : index
    %30 = vector.load %arg5[%c0_12, %c0_13] : memref<32x8xf32, #tpu.memory_space<vmem>>, vector<32x8xf32>
    %c0_14 = arith.constant 0 : index
    %c0_15 = arith.constant 0 : index
    %c0_16 = arith.constant 0 : index
    %31 = vector.load %arg1[%c0_14, %c0_15, %c0_16] : memref<1x8x128xf32, #tpu.memory_space<vmem>>, vector<1x8x128xf32>
    %32 = vector.shape_cast %31 : vector<1x8x128xf32> to vector<8x128xf32>
    %33 = vector.broadcast %27 : vector<8x1xf32> to vector<8x128xf32>
    %34 = arith.mulf %32, %33 : vector<8x128xf32>
    %35 = vector.broadcast %29 : vector<8x1xf32> to vector<8x128xf32>
    %36 = arith.addf %34, %35 : vector<8x128xf32>
    %cst_17 = arith.constant 0.000000e+00 : f32
    %37 = vector.broadcast %cst_17 : f32 to vector<8x128xf32>
    %38 = arith.maximumf %36, %37 : vector<8x128xf32>
    %39 = vector.broadcast %4 : vector<1x128xf32> to vector<8x128xf32>
    %40 = arith.mulf %38, %39 : vector<8x128xf32>
    %cst_18 = arith.constant dense<0.000000e+00> : vector<32x128xf32>
    %41 = tpu.matmul %30, %40, %cst_18 {dimension_numbers = #tpu.dot_dimension_numbers<[1], [0], [0], [1], [0, 0, 1, 1], [], []>} : vector<32x8xf32>, vector<8x128xf32>, vector<32x128xf32> -> vector<32x128xf32>
    %cst_19 = arith.constant dense<0.000000e+00> : vector<32xf32>
    %42 = vector.multi_reduction <add>, %41, %cst_19 [1] : vector<32x128xf32> to vector<32xf32>
    %43 = vector.shape_cast %42 : vector<32xf32> to vector<32x1xf32>
    %cst_20 = arith.constant 6.250000e-02 : f32
    %44 = vector.broadcast %cst_20 : f32 to vector<32x1xf32>
    %45 = arith.mulf %43, %44 : vector<32x1xf32>
    %46 = vector.broadcast %45 : vector<32x1xf32> to vector<32x128xf32>
    %47 = arith.subf %41, %46 : vector<32x128xf32>
    %48 = arith.mulf %47, %47 : vector<32x128xf32>
    %49 = vector.broadcast %4 : vector<1x128xf32> to vector<32x128xf32>
    %50 = arith.mulf %49, %48 : vector<32x128xf32>
    %cst_21 = arith.constant dense<0.000000e+00> : vector<32xf32>
    %51 = vector.multi_reduction <add>, %50, %cst_21 [1] : vector<32x128xf32> to vector<32xf32>
    %52 = vector.shape_cast %51 : vector<32xf32> to vector<32x1xf32>
    %53 = tpu.concatenate %45, %52 in 1 : vector<32x1xf32>, vector<32x1xf32> -> vector<32x2xf32>
    %c0_22 = arith.constant 0 : index
    %c0_23 = arith.constant 0 : index
    %c0_24 = arith.constant 0 : index
    %54 = vector.load %arg7[%c0_22, %c0_23, %c0_24] : memref<1x32x2xf32, #tpu.memory_space<vmem>>, vector<1x32x2xf32>
    %55 = vector.shape_cast %54 : vector<1x32x2xf32> to vector<32x2xf32>
    %56 = vector.shape_cast %53 : vector<32x2xf32> to vector<1x32x2xf32>
    tpu.vector_store %arg7[%c0_22, %c0_23, %c0_24], %56 {strides = array<i32>} : memref<1x32x2xf32, #tpu.memory_space<vmem>>, vector<1x32x2xf32>,
    %c0_25 = arith.constant 0 : index
    %c0_26 = arith.constant 0 : index
    %c0_27 = arith.constant 0 : index
    %57 = vector.load %arg6[%c0_25, %c0_26, %c0_27] : memref<1x32x128xf32, #tpu.memory_space<vmem>>, vector<1x32x128xf32>
    %58 = vector.shape_cast %57 : vector<1x32x128xf32> to vector<32x128xf32>
    %59 = vector.shape_cast %41 : vector<32x128xf32> to vector<1x32x128xf32>
    tpu.vector_store %arg6[%c0_25, %c0_26, %c0_27], %59 {strides = array<i32>} : memref<1x32x128xf32, #tpu.memory_space<vmem>>, vector<1x32x128xf32>,
    return
  }
  func.func @transform_0(%arg0: i32) -> (i32, i32, i32) {
    %c0_i32 = arith.constant 0 : i32
    %c0_i32_0 = arith.constant 0 : i32
    %c0_i32_1 = arith.constant 0 : i32
    return %arg0, %c0_i32, %c0_i32_0 : i32, i32, i32
  }
  func.func @transform_1(%arg0: i32) -> (i32, i32, i32) {
    %c0_i32 = arith.constant 0 : i32
    %c0_i32_0 = arith.constant 0 : i32
    %c0_i32_1 = arith.constant 0 : i32
    %c0_i32_2 = arith.constant 0 : i32
    return %c0_i32, %c0_i32_0, %c0_i32_1 : i32, i32, i32
  }
  func.func @transform_2(%arg0: i32) -> (i32, i32) {
    %c0_i32 = arith.constant 0 : i32
    %c0_i32_0 = arith.constant 0 : i32
    %c0_i32_1 = arith.constant 0 : i32
    return %c0_i32, %c0_i32_0 : i32, i32
  }
  func.func @transform_3(%arg0: i32) -> (i32, i32) {
    %c0_i32 = arith.constant 0 : i32
    %c0_i32_0 = arith.constant 0 : i32
    %c0_i32_1 = arith.constant 0 : i32
    return %c0_i32, %c0_i32_0 : i32, i32
  }
  func.func @transform_4(%arg0: i32) -> (i32, i32) {
    %c0_i32 = arith.constant 0 : i32
    %c0_i32_0 = arith.constant 0 : i32
    %c0_i32_1 = arith.constant 0 : i32
    return %c0_i32, %c0_i32_0 : i32, i32
  }
  func.func @transform_5(%arg0: i32) -> (i32, i32, i32) {
    %c0_i32 = arith.constant 0 : i32
    %c0_i32_0 = arith.constant 0 : i32
    %c0_i32_1 = arith.constant 0 : i32
    return %arg0, %c0_i32, %c0_i32_0 : i32, i32, i32
  }
  func.func @transform_6(%arg0: i32) -> (i32, i32, i32) {
    %c0_i32 = arith.constant 0 : i32
    %c0_i32_0 = arith.constant 0 : i32
    %c0_i32_1 = arith.constant 0 : i32
    return %arg0, %c0_i32, %c0_i32_0 : i32, i32, i32
  }
}

module attributes {stable_mosaic.version = 11 : i64} {
  func.func @_stage4_kernel(%arg0: i32, %arg1: memref<1x32x128xf32, #tpu.memory_space<vmem>>, %arg2: memref<2x32x2xf32, #tpu.memory_space<vmem>>, %arg3: memref<32x1xf32, #tpu.memory_space<vmem>>, %arg4: memref<32x1xf32, #tpu.memory_space<vmem>>, %arg5: memref<1x32x128xf32, #tpu.memory_space<vmem>>, %arg6: memref<1x32x128xf32, #tpu.memory_space<vmem>>) attributes {dimension_semantics = [#tpu.dimension_semantics<parallel>], iteration_bounds = array<i64: 2>, scalar_prefetch = 0 : i64, scratch_operands = 0 : i64, tpu.core_type = #tpu.core_type<tc>, window_params = [{transform_indices = @transform_0, window_bounds = array<i64: 1, 32, 128>}, {pipeline_mode = #tpu.pipeline_mode<synchronous>, transform_indices = @transform_1, window_bounds = array<i64: 2, 32, 2>}, {pipeline_mode = #tpu.pipeline_mode<synchronous>, transform_indices = @transform_2, window_bounds = array<i64: 32, 1>}, {pipeline_mode = #tpu.pipeline_mode<synchronous>, transform_indices = @transform_3, window_bounds = array<i64: 32, 1>}, {transform_indices = @transform_4, window_bounds = array<i64: 1, 32, 128>}, {transform_indices = @transform_5, window_bounds = array<i64: 1, 32, 128>}]} {
    %c0 = arith.constant 0 : index
    %c0_0 = arith.constant 0 : index
    %c0_1 = arith.constant 0 : index
    %0 = vector.load %arg2[%c0, %c0_0, %c0_1] : memref<2x32x2xf32, #tpu.memory_space<vmem>>, vector<2x32x2xf32>
    %c0_2 = arith.constant 0 : index
    %c0_3 = arith.constant 0 : index
    %1 = vector.load %arg3[%c0_2, %c0_3] : memref<32x1xf32, #tpu.memory_space<vmem>>, vector<32x1xf32>
    %c0_4 = arith.constant 0 : index
    %c0_5 = arith.constant 0 : index
    %2 = vector.load %arg4[%c0_4, %c0_5] : memref<32x1xf32, #tpu.memory_space<vmem>>, vector<32x1xf32>
    %3 = vector.extract_strided_slice %0 {offsets = [0, 0, 0], sizes = [2, 32, 1], strides = [1, 1, 1]} : vector<2x32x2xf32> to vector<2x32x1xf32>
    %4 = vector.extract_strided_slice %0 {offsets = [0, 0, 1], sizes = [2, 32, 1], strides = [1, 1, 1]} : vector<2x32x2xf32> to vector<2x32x1xf32>
    %cst = arith.constant dense<0.000000e+00> : vector<32x1xf32>
    %5 = vector.multi_reduction <add>, %3, %cst [0] : vector<2x32x1xf32> to vector<32x1xf32>
    %cst_6 = arith.constant 2.000000e+00 : f32
    %6 = vector.broadcast %cst_6 : f32 to vector<32x1xf32>
    %7 = arith.divf %5, %6 : vector<32x1xf32>
    %cst_7 = arith.constant dense<0.000000e+00> : vector<32x1xf32>
    %8 = vector.multi_reduction <add>, %4, %cst_7 [0] : vector<2x32x1xf32> to vector<32x1xf32>
    %9 = vector.shape_cast %7 : vector<32x1xf32> to vector<1x32x1xf32>
    %10 = vector.broadcast %9 : vector<1x32x1xf32> to vector<2x32x1xf32>
    %11 = arith.subf %3, %10 : vector<2x32x1xf32>
    %12 = arith.mulf %11, %11 : vector<2x32x1xf32>
    %cst_8 = arith.constant dense<0.000000e+00> : vector<32x1xf32>
    %13 = vector.multi_reduction <add>, %12, %cst_8 [0] : vector<2x32x1xf32> to vector<32x1xf32>
    %cst_9 = arith.constant 1.600000e+01 : f32
    %14 = vector.broadcast %cst_9 : f32 to vector<32x1xf32>
    %15 = arith.mulf %14, %13 : vector<32x1xf32>
    %16 = arith.addf %8, %15 : vector<32x1xf32>
    %cst_10 = arith.constant 3.125000e-02 : f32
    %17 = vector.broadcast %cst_10 : f32 to vector<32x1xf32>
    %18 = arith.mulf %16, %17 : vector<32x1xf32>
    %cst_11 = arith.constant 9.99999974E-6 : f32
    %19 = vector.broadcast %cst_11 : f32 to vector<32x1xf32>
    %20 = arith.addf %18, %19 : vector<32x1xf32>
    %21 = math.rsqrt %20 : vector<32x1xf32>
    %22 = arith.mulf %1, %21 : vector<32x1xf32>
    %23 = arith.mulf %7, %22 : vector<32x1xf32>
    %24 = arith.subf %2, %23 : vector<32x1xf32>
    %c0_12 = arith.constant 0 : index
    %c0_13 = arith.constant 0 : index
    %c0_14 = arith.constant 0 : index
    %25 = vector.load %arg1[%c0_12, %c0_13, %c0_14] : memref<1x32x128xf32, #tpu.memory_space<vmem>>, vector<1x32x128xf32>
    %26 = vector.shape_cast %25 : vector<1x32x128xf32> to vector<32x128xf32>
    %27 = vector.broadcast %22 : vector<32x1xf32> to vector<32x128xf32>
    %28 = arith.mulf %26, %27 : vector<32x128xf32>
    %29 = vector.broadcast %24 : vector<32x1xf32> to vector<32x128xf32>
    %30 = arith.addf %28, %29 : vector<32x128xf32>
    %c0_15 = arith.constant 0 : index
    %c0_16 = arith.constant 0 : index
    %c0_17 = arith.constant 0 : index
    %31 = vector.load %arg5[%c0_15, %c0_16, %c0_17] : memref<1x32x128xf32, #tpu.memory_space<vmem>>, vector<1x32x128xf32>
    %32 = vector.shape_cast %31 : vector<1x32x128xf32> to vector<32x128xf32>
    %33 = arith.addf %30, %32 : vector<32x128xf32>
    %cst_18 = arith.constant 0.000000e+00 : f32
    %34 = vector.broadcast %cst_18 : f32 to vector<32x128xf32>
    %35 = arith.maximumf %33, %34 : vector<32x128xf32>
    %c0_19 = arith.constant 0 : index
    %c0_20 = arith.constant 0 : index
    %c0_21 = arith.constant 0 : index
    %36 = vector.load %arg6[%c0_19, %c0_20, %c0_21] : memref<1x32x128xf32, #tpu.memory_space<vmem>>, vector<1x32x128xf32>
    %37 = vector.shape_cast %36 : vector<1x32x128xf32> to vector<32x128xf32>
    %38 = vector.shape_cast %35 : vector<32x128xf32> to vector<1x32x128xf32>
    tpu.vector_store %arg6[%c0_19, %c0_20, %c0_21], %38 {strides = array<i32>} : memref<1x32x128xf32, #tpu.memory_space<vmem>>, vector<1x32x128xf32>,
    return
  }
  func.func @transform_0(%arg0: i32) -> (i32, i32, i32) {
    %c0_i32 = arith.constant 0 : i32
    %c0_i32_0 = arith.constant 0 : i32
    %c0_i32_1 = arith.constant 0 : i32
    return %arg0, %c0_i32, %c0_i32_0 : i32, i32, i32
  }
  func.func @transform_1(%arg0: i32) -> (i32, i32, i32) {
    %c0_i32 = arith.constant 0 : i32
    %c0_i32_0 = arith.constant 0 : i32
    %c0_i32_1 = arith.constant 0 : i32
    %c0_i32_2 = arith.constant 0 : i32
    return %c0_i32, %c0_i32_0, %c0_i32_1 : i32, i32, i32
  }
  func.func @transform_2(%arg0: i32) -> (i32, i32) {
    %c0_i32 = arith.constant 0 : i32
    %c0_i32_0 = arith.constant 0 : i32
    %c0_i32_1 = arith.constant 0 : i32
    return %c0_i32, %c0_i32_0 : i32, i32
  }
  func.func @transform_3(%arg0: i32) -> (i32, i32) {
    %c0_i32 = arith.constant 0 : i32
    %c0_i32_0 = arith.constant 0 : i32
    %c0_i32_1 = arith.constant 0 : i32
    return %c0_i32, %c0_i32_0 : i32, i32
  }
  func.func @transform_4(%arg0: i32) -> (i32, i32, i32) {
    %c0_i32 = arith.constant 0 : i32
    %c0_i32_0 = arith.constant 0 : i32
    %c0_i32_1 = arith.constant 0 : i32
    return %arg0, %c0_i32, %c0_i32_0 : i32, i32, i32
  }
  func.func @transform_5(%arg0: i32) -> (i32, i32, i32) {
    %c0_i32 = arith.constant 0 : i32
    %c0_i32_0 = arith.constant 0 : i32
    %c0_i32_1 = arith.constant 0 : i32
    return %arg0, %c0_i32, %c0_i32_0 : i32, i32, i32
  }
}

</mosaic_0001>

<llo_original>
// kernel: bottleneck_forward.4
$region0: #{bottleneck_forward.4}
  #allocation0 [shape = 'u32[]', space=smem, size = 0x4, offset = 0x4, fixed_abs, tag = 'smem constant byte address 0x4 - core index']
  #allocation1 [shape = 'u32[144,128]{1,0:T(1,128)}', space=vmem, size = 0x12000, scoped, tag = 'internal scratch']
  %s0 = inlined_call_operand.vmem [shape: f32[2,32,128], index: 0, kind: input, shape index: {}]
  %s1 = inlined_call_operand.vmem [shape: f32[8,32], index: 1, kind: input, shape index: {}]
  %s2 = inlined_call_operand.vmem [shape: f32[2,8,128], index: 2, kind: output, shape index: {0}]
  %s3 = inlined_call_operand.vmem [shape: f32[2,8,2], index: 3, kind: output, shape index: {1}]
  %4 = xla_tuple %s2, %s3
  %s5 = sld [smem:[#allocation0]]
  $region49: #{bottleneck_forward.4} parent=0
    _
  %s7 = ssub.s32 1, %s5
  %s8 = scalar_select 0, %s7, %s5
  loop: start=0, step=1, limit=4
  $region2: #{bottleneck_forward.4} parent=0 // loop_pre_header
    _
  $region3: #{bottleneck_forward.4} parent=0 // loop_header
    %s10 = sphi 0, %s14
    %p11 = scmp.ge.s32.totalorder %s10, 4
    %s20 = sphi 0, %s22
    %s23 = sphi 0, %s20
    %s24 = sphi 0, %s23
    %s40 = sphi 0, %s24
    %s44 = sphi 0, %s44
    %s46 = sphi 0, %s44
    %s47 = sphi 0, %s46
    %s61 = sphi 0, %s47
    %s67 = sphi 0, %s69
    %s70 = sphi 0, %s67
    %s71 = sphi 0, %s70
    %s87 = sphi 0, %s71
    %s93 = sphi 0, %s95
    %s96 = sphi 0, %s93
    %s97 = sphi 0, %s96
    %s113 = sphi 0, %s97
  $region4: #{bottleneck_forward.4} parent=0 // loop_header_branch
    %13 = sbr.rel (%p11) target = $region8
  $region5: #{bottleneck_forward.4} parent=0 // loop_body
    %s15 = ssub.s32 %s10, 1
    %s16 = ssub.s32 %s10, 2
    %s17 = sadd.s32 %s10, 1
    %s18 = ssub.s32 %s10, %s17
    %p19 = scmp.eq.s32.totalorder %s18, 0
    %s21 = sadd.s32 %s20, 1
    %s22 = scalar_select %p19, %s20, %s21
    %p25 = pneg %p19
    %p26 = scmp.eq.s32.totalorder %s10, 1
    %p27 = por %p25, %p26
    %p28 = scmp.ne.s32.totalorder %s20, %s23
    %p29 = scmp.eq.s32.totalorder %s10, 0
    %p30 = por %p28, %p29
    %p31 = scmp.ne.s32.totalorder %s20, %s23
    %p32 = scmp.eq.s32.totalorder %s15, 1
    %p33 = por %p31, %p32
    %p34 = scmp.ne.s32.totalorder %s23, %s24
    %p35 = scmp.eq.s32.totalorder %s15, 0
    %p36 = por %p34, %p35
    %p37 = scmp.ne.s32.totalorder %s23, %s24
    %p38 = scmp.eq.s32.totalorder %s16, 1
    %p39 = por %p37, %p38
    %p41 = scmp.ne.s32.totalorder %s24, %s40
    %p42 = scmp.eq.s32.totalorder %s16, 0
    %p43 = por %p41, %p42
    %s45 = sadd.s32 %s44, 1
    %p48 = scmp.eq.s32.totalorder %s10, 1
    %p49 = scmp.ne.s32.totalorder %s44, %s46
    %p50 = scmp.eq.s32.totalorder %s10, 0
    %p51 = por %p49, %p50
    %p52 = scmp.ne.s32.totalorder %s44, %s46
    %p53 = scmp.eq.s32.totalorder %s15, 1
    %p54 = por %p52, %p53
    %p55 = scmp.ne.s32.totalorder %s46, %s47
    %p56 = scmp.eq.s32.totalorder %s15, 0
    %p57 = por %p55, %p56
    %p58 = scmp.ne.s32.totalorder %s46, %s47
    %p59 = scmp.eq.s32.totalorder %s16, 1
    %p60 = por %p58, %p59
    %p62 = scmp.ne.s32.totalorder %s47, %s61
    %p63 = scmp.eq.s32.totalorder %s16, 0
    %p64 = por %p62, %p63
    %s65 = ssub.s32 %s10, %s17
    %p66 = scmp.eq.s32.totalorder %s65, 0
    %s68 = sadd.s32 %s67, 1
    %s69 = scalar_select %p66, %s67, %s68
    %p72 = pneg %p66
    %p73 = scmp.eq.s32.totalorder %s10, 1
    %p74 = por %p72, %p73
    %p75 = scmp.ne.s32.totalorder %s67, %s70
    %p76 = scmp.eq.s32.totalorder %s10, 0
    %p77 = por %p75, %p76
    %p78 = scmp.ne.s32.totalorder %s67, %s70
    %p79 = scmp.eq.s32.totalorder %s15, 1
    %p80 = por %p78, %p79
    %p81 = scmp.ne.s32.totalorder %s70, %s71
    %p82 = scmp.eq.s32.totalorder %s15, 0
    %p83 = por %p81, %p82
    %p84 = scmp.ne.s32.totalorder %s70, %s71
    %p85 = scmp.eq.s32.totalorder %s16, 1
    %p86 = por %p84, %p85
    %p88 = scmp.ne.s32.totalorder %s71, %s87
    %p89 = scmp.eq.s32.totalorder %s16, 0
    %p90 = por %p88, %p89
    %s91 = ssub.s32 %s10, %s17
    %p92 = scmp.eq.s32.totalorder %s91, 0
    %s94 = sadd.s32 %s93, 1
    %s95 = scalar_select %p92, %s93, %s94
    %p98 = pneg %p92
    %p99 = scmp.eq.s32.totalorder %s10, 1
    %p100 = por %p98, %p99
    %p101 = scmp.ne.s32.totalorder %s93, %s96
    %p102 = scmp.eq.s32.totalorder %s10, 0
    %p103 = por %p101, %p102
    %p104 = scmp.ne.s32.totalorder %s93, %s96
    %p105 = scmp.eq.s32.totalorder %s15, 1
    %p106 = por %p104, %p105
    %p107 = scmp.ne.s32.totalorder %s96, %s97
    %p108 = scmp.eq.s32.totalorder %s15, 0
    %p109 = por %p107, %p108
    %p110 = scmp.ne.s32.totalorder %s96, %s97
    %p111 = scmp.eq.s32.totalorder %s16, 1
    %p112 = por %p110, %p111
    %p114 = scmp.ne.s32.totalorder %s97, %s113
    %p115 = scmp.eq.s32.totalorder %s16, 0
    %p116 = por %p114, %p115
    %p117 = scmp.le.s32.totalorder 1, %s10
    %p118 = scmp.lt.s32.totalorder %s10, 3
    %p119 = pnand %p117, %p118
    %p120 = pneg %p119
    // Predicated region
    $region9: #{bottleneck_forward.4} parent=5 // pred_check
      _
    $region10: #{bottleneck_forward.4} parent=5 // pred_check_branch
      %122 = sbr.rel (%p119) target = $region12
    $region11: #{bottleneck_forward.4} parent=5 // pred_region
      %s123 = ssub.s32 %s10, 1
      // Predicated region
      $region13: #{bottleneck_forward.4} parent=11 // pred_check
        %p124 = pneg %p57
      $region14: #{bottleneck_forward.4} parent=11 // pred_check_branch
        %126 = sbr.rel (%p124) target = $region16
      $region15: #{bottleneck_forward.4} parent=11 // pred_region
        _
      $region16: #{bottleneck_forward.4} parent=11 // pred_fallthru
        _
    $region12: #{bottleneck_forward.4} parent=5 // pred_fallthru
      _
    %p127 = scmp.lt.s32.totalorder %s10, 2
    // Predicated region
    $region17: #{bottleneck_forward.4} parent=5 // pred_check
      %p128 = pneg %p127
    $region18: #{bottleneck_forward.4} parent=5 // pred_check_branch
      %130 = sbr.rel (%p128) target = $region20
    $region19: #{bottleneck_forward.4} parent=5 // pred_region
      // Predicated region
      $region21: #{bottleneck_forward.4} parent=19 // pred_check
        %p131 = pneg %p30
      $region22: #{bottleneck_forward.4} parent=19 // pred_check_branch
        %133 = sbr.rel (%p131) target = $region24
      $region23: #{bottleneck_forward.4} parent=19 // pred_region
        %p134 = scmp.lt.s32.totalorder %s10, 1
        %s135 = scalar_select %p134, %s10, 1
        %s136 = smul.addr %s135, 4
        %s137 = smul.addr %s136, 8
        %s138 = scalar_lea.vmem %s0, %s137
      $region24: #{bottleneck_forward.4} parent=19 // pred_fallthru
        _
    $region20: #{bottleneck_forward.4} parent=5 // pred_fallthru
      _
    %p139 = scmp.le.s32.totalorder 1, %s10
    %p140 = scmp.lt.s32.totalorder %s10, 3
    %p141 = pnand %p139, %p140
    %p142 = pneg %p141
    // Predicated region
    $region25: #{bottleneck_forward.4} parent=5 // pred_check
      _
    $region26: #{bottleneck_forward.4} parent=5 // pred_check_branch
      %144 = sbr.rel (%p141) target = $region28
    $region27: #{bottleneck_forward.4} parent=5 // pred_region
      %s145 = ssub.s32 %s10, 1
      %p146 = scmp.lt.s32.totalorder %s15, 1
      %s147 = scalar_select %p146, %s15, 1
      %s148 = smul.addr %s147, 4
      %s149 = smul.addr %s148, 8
      %s150 = scalar_lea.vmem %s0, %s149
      %p151 = pneg %p36
      %p152 = pneg %p33
      %p153 = pneg %p57
      %p154 = pneg %p54
      %p155 = pneg %p83
      %p156 = pneg %p80
      %p157 = scmp.lt.s32.totalorder %s15, 1
      %s158 = scalar_select %p157, %s15, 1
      %s159 = smul.addr %s158, 8
      %s160 = scalar_lea.vmem %s2, %s159
      %p161 = pneg %p109
      %p162 = pneg %p106
      %p163 = scmp.lt.s32.totalorder %s15, 1
      %s164 = scalar_select %p163, %s15, 1
      %s165 = smul.addr %s164, 8
      %s166 = scalar_lea.vmem %s3, %s165
      %p167 = scmp.lt.s32.totalorder %s15, 1
      %s168 = scalar_select %p167, %s15, 1
      %s169 = smul.addr %s168, 4
      %s170 = smul.addr %s169, 8
      %s171 = scalar_lea.vmem %s0, %s170
      %p172 = scmp.lt.s32.totalorder %s15, 1
      %s173 = scalar_select %p172, %s15, 1
      %s174 = smul.addr %s173, 8
      %s175 = scalar_lea.vmem %s2, %s174
      %p176 = scmp.lt.s32.totalorder %s15, 1
      %s177 = scalar_select %p176, %s15, 1
      %s178 = smul.addr %s177, 8
      %s179 = scalar_lea.vmem %s3, %s178
      %v180 = vlaneseq
      %v181 = vand.u32 %v180, 127
      %vm182 = vcmp.lt.s32.totalorder %v181, 16
      %v183 = vsel %vm182, 1, 0
      %v184 = vcvt.s32.f32 %v183
      %v185 = vld [vmem:[%s1] sm:$0xff]
      %v186 = vld [vmem:[%s171] sm:$0xff]
      %v187 = vld [vmem:[%s171 + $0x8] sm:$0xff]
      %v188 = vld [vmem:[%s171 + $0x10] sm:$0xff]
      %v189 = vld [vmem:[%s171 + $0x18] sm:$0xff]
      %vm190 = vcmask 261120
      %v192 = vsel %vm190, %v185, 0
      %194 = vmatprep.subr.mxu0 0.0
      %195 = vmatpush1.msra.mxu0 %v186
      %196 = vmatprep.subr.mxu0 0.0
      %197 = vmatpush1.msra.mxu0 %v187
      %198 = vmatprep.subr.mxu0 0.0
      %199 = vmatpush1.msra.mxu0 %v188
      %200 = vmatprep.subr.mxu0 0.0
      %201 = vmatpush1.msra.mxu0 %v189
      %202 = vmatprep.subr.mxu0 0.0
      %203 = vmatpush1.msra.mxu0 0.0
      %204 = vmatprep.subr.mxu0 0.0
      %205 = vmatpush1.msra.mxu0 0.0
      %206 = vmatprep.subr.mxu0 0.0
      %207 = vmatpush1.msra.mxu0 0.0
      %208 = vmatprep.subr.mxu0 0.0
      %209 = vmatpush1.msra.mxu0 0.0
      %210 = vmatprep.subr.mxu0 0.0
      %211 = vmatpush1.msra.mxu0 0.0
      %212 = vmatprep.subr.mxu0 0.0
      %213 = vmatpush1.msra.mxu0 0.0
      %214 = vmatprep.subr.mxu0 0.0
      %215 = vmatpush1.msra.mxu0 0.0
      %216 = vmatprep.subr.mxu0 0.0
      %217 = vmatpush1.msra.mxu0 0.0
      %218 = vmatprep.subr.mxu0 0.0
      %219 = vmatpush1.msra.mxu0 0.0
      %220 = vmatprep.subr.mxu0 0.0
      %221 = vmatpush1.msra.mxu0 0.0
      %222 = vmatprep.subr.mxu0 0.0
      %223 = vmatpush1.msra.mxu0 0.0
      %224 = vmatprep.subr.mxu0 0.0
      %225 = vmatpush1.msra.mxu0 0.0
      %226 = vmatprep.subr.mxu0 0.0
      %227 = vmatpush1.msra.mxu0 0.0
      %228 = vmatprep.subr.mxu0 0.0
      %229 = vmatpush1.msra.mxu0 0.0
      %230 = vmatprep.subr.mxu0 0.0
      %231 = vmatpush1.msra.mxu0 0.0
      %232 = vmatprep.subr.mxu0 0.0
      %233 = vmatpush1.msra.mxu0 0.0
      %234 = vmatprep.subr.mxu0 0.0
      %235 = vmatpush1.msra.mxu0 0.0
      %236 = vmatprep.subr.mxu0 0.0
      %237 = vmatpush1.msra.mxu0 0.0
      %238 = vmatprep.subr.mxu0 0.0
      %239 = vmatpush1.msra.mxu0 0.0
      %240 = vmatprep.subr.mxu0 0.0
      %241 = vmatpush1.msra.mxu0 0.0
      %242 = vmatprep.subr.mxu0 0.0
      %243 = vmatpush1.msra.mxu0 0.0
      %244 = vmatprep.subr.mxu0 0.0
      %245 = vmatpush1.msra.mxu0 0.0
      %246 = vmatprep.subr.mxu0 0.0
      %247 = vmatpush1.msra.mxu0 0.0
      %248 = vmatprep.subr.mxu0 0.0
      %249 = vmatpush1.msra.mxu0 0.0
      %250 = vmatprep.subr.mxu0 0.0
      %251 = vmatpush1.msra.mxu0 0.0
      %252 = vmatprep.subr.mxu0 0.0
      %253 = vmatpush1.msra.mxu0 0.0
      %254 = vmatprep.subr.mxu0 0.0
      %255 = vmatpush1.msra.mxu0 0.0
      %256 = vmatprep.subr.mxu0 0.0
      %257 = vmatpush1.msra.mxu0 0.0
      %258 = vmatprep.mubr.f32.mxu0 0.0
      %259 = vmatmul.mubr.f32.gmra.mrb[0].mxu0 %v192
      %v260 = vpop.f32.mrb[0].mxu0
      %v261 = vadd.f32 0.0, %v260
      %v262 = vpop.f32.mrb[0].mxu0
      %263 = vdwg.mxu0
      %264 = vadd.xlane.f32.xlu0 %v261
      %v265 = vpop.xlane.xlu0 %264
      %v266 = vmul.f32 %v265, 0.0625
      %v267 = vsub.f32 %v261, %v266
      %v268 = vmul.f32 %v267, %v267
      %v269 = vmul.f32 %v184, %v268
      %270 = vadd.xlane.f32.xlu0 %v269
      %v271 = vpop.xlane.xlu0 %270
      %vm272 = vcmask 7168
      %v273 = vsel %vm272, %v266, %v271
      %vm274 = vcmask 15360
      %275 = vst.msk [vmem:[%s179] sm:$0xff] %vm274, %v273
      %276 = vst [vmem:[%s175] sm:$0xff] %v261
      %p277 = scmp.lt.s32.totalorder %s15, 1
      %s278 = scalar_select %p277, %s15, 1
      %s279 = smul.addr %s278, 8
      %s280 = scalar_lea.vmem %s2, %s279
      %p281 = scmp.lt.s32.totalorder %s15, 1
      %s282 = scalar_select %p281, %s15, 1
      %s283 = smul.addr %s282, 8
      %s284 = scalar_lea.vmem %s3, %s283
      // Predicated region
      $region29: #{bottleneck_forward.4} parent=27 // pred_check
        %p285 = pneg %p80
      $region30: #{bottleneck_forward.4} parent=27 // pred_check_branch
        %287 = sbr.rel (%p285) target = $region32
      $region31: #{bottleneck_forward.4} parent=27 // pred_region
        _
      $region32: #{bottleneck_forward.4} parent=27 // pred_fallthru
        _
      // Predicated region
      $region33: #{bottleneck_forward.4} parent=27 // pred_check
        %p288 = pneg %p106
      $region34: #{bottleneck_forward.4} parent=27 // pred_check_branch
        %290 = sbr.rel (%p288) target = $region36
      $region35: #{bottleneck_forward.4} parent=27 // pred_region
        _
      $region36: #{bottleneck_forward.4} parent=27 // pred_fallthru
        _
    $region28: #{bottleneck_forward.4} parent=5 // pred_fallthru
      _
    %p291 = scmp.le.s32.totalorder 2, %s10
    // Predicated region
    $region37: #{bottleneck_forward.4} parent=5 // pred_check
      %p292 = pneg %p291
    $region38: #{bottleneck_forward.4} parent=5 // pred_check_branch
      %294 = sbr.rel (%p292) target = $region40
    $region39: #{bottleneck_forward.4} parent=5 // pred_region
      %s295 = ssub.s32 %s10, 2
      // Predicated region
      $region41: #{bottleneck_forward.4} parent=39 // pred_check
        %p296 = pneg %p86
      $region42: #{bottleneck_forward.4} parent=39 // pred_check_branch
        %298 = sbr.rel (%p296) target = $region44
      $region43: #{bottleneck_forward.4} parent=39 // pred_region
        %p299 = scmp.lt.s32.totalorder %s16, 1
        %s300 = scalar_select %p299, %s16, 1
        %s301 = smul.addr %s300, 8
        %s302 = scalar_lea.vmem %s2, %s301
      $region44: #{bottleneck_forward.4} parent=39 // pred_fallthru
        _
      // Predicated region
      $region45: #{bottleneck_forward.4} parent=39 // pred_check
        %p303 = pneg %p112
      $region46: #{bottleneck_forward.4} parent=39 // pred_check_branch
        %305 = sbr.rel (%p303) target = $region48
      $region47: #{bottleneck_forward.4} parent=39 // pred_region
        %p306 = scmp.lt.s32.totalorder %s16, 1
        %s307 = scalar_select %p306, %s16, 1
        %s308 = smul.addr %s307, 8
        %s309 = scalar_lea.vmem %s3, %s308
      $region48: #{bottleneck_forward.4} parent=39 // pred_fallthru
        _
    $region40: #{bottleneck_forward.4} parent=5 // pred_fallthru
      _
  $region6: #{bottleneck_forward.4} parent=0 // loop_footer
    %s14 = sadd.s32 1, %s10
  $region7: #{bottleneck_forward.4} parent=0 // loop_footer_branch
    %9 = sbr.rel target = $region3
  $region8: #{bottleneck_forward.4} parent=0 // loop_exit
    _

// kernel: bottleneck_forward.7
$region0: #{bottleneck_forward.7}
  #allocation0 [shape = 'u32[]', space=smem, size = 0x4, offset = 0x4, fixed_abs, tag = 'smem constant byte address 0x4 - core index']
  #allocation1 [shape = 'u32[144,128]{1,0:T(1,128)}', space=vmem, size = 0x12000, scoped, tag = 'internal scratch']
  %s0 = inlined_call_operand.vmem [shape: f32[2,32,128], index: 0, kind: input, shape index: {}]
  %s1 = inlined_call_operand.vmem [shape: f32[2,32,2], index: 1, kind: input, shape index: {}]
  %s2 = inlined_call_operand.vmem [shape: f32[32,1], index: 2, kind: input, shape index: {}]
  %s3 = inlined_call_operand.vmem [shape: f32[32,1], index: 3, kind: input, shape index: {}]
  %s4 = inlined_call_operand.vmem [shape: f32[2,32,128], index: 4, kind: input, shape index: {}]
  %s5 = inlined_call_operand.vmem [shape: f32[2,32,128], index: 5, kind: output, shape index: {}]
  %s6 = sld [smem:[#allocation0]]
  $region53: #{bottleneck_forward.7} parent=0
    _
  %s8 = ssub.s32 1, %s6
  %s9 = scalar_select 0, %s8, %s6
  loop: start=0, step=1, limit=4
  $region2: #{bottleneck_forward.7} parent=0 // loop_pre_header
    _
  $region3: #{bottleneck_forward.7} parent=0 // loop_header
    %s11 = sphi 0, %s15
    %p12 = scmp.ge.s32.totalorder %s11, 4
    %s21 = sphi 0, %s23
    %s24 = sphi 0, %s21
    %s25 = sphi 0, %s24
    %s41 = sphi 0, %s25
    %s45 = sphi 0, %s45
    %s47 = sphi 0, %s45
    %s48 = sphi 0, %s47
    %s62 = sphi 0, %s48
    %s66 = sphi 0, %s66
    %s68 = sphi 0, %s66
    %s69 = sphi 0, %s68
    %s83 = sphi 0, %s69
    %s87 = sphi 0, %s87
    %s89 = sphi 0, %s87
    %s90 = sphi 0, %s89
    %s104 = sphi 0, %s90
    %s110 = sphi 0, %s112
    %s113 = sphi 0, %s110
    %s114 = sphi 0, %s113
    %s130 = sphi 0, %s114
    %s136 = sphi 0, %s138
    %s139 = sphi 0, %s136
    %s140 = sphi 0, %s139
    %s156 = sphi 0, %s140
  $region4: #{bottleneck_forward.7} parent=0 // loop_header_branch
    %14 = sbr.rel (%p12) target = $region8
  $region5: #{bottleneck_forward.7} parent=0 // loop_body
    %s16 = ssub.s32 %s11, 1
    %s17 = ssub.s32 %s11, 2
    %s18 = sadd.s32 %s11, 1
    %s19 = ssub.s32 %s11, %s18
    %p20 = scmp.eq.s32.totalorder %s19, 0
    %s22 = sadd.s32 %s21, 1
    %s23 = scalar_select %p20, %s21, %s22
    %p26 = pneg %p20
    %p27 = scmp.eq.s32.totalorder %s11, 1
    %p28 = por %p26, %p27
    %p29 = scmp.ne.s32.totalorder %s21, %s24
    %p30 = scmp.eq.s32.totalorder %s11, 0
    %p31 = por %p29, %p30
    %p32 = scmp.ne.s32.totalorder %s21, %s24
    %p33 = scmp.eq.s32.totalorder %s16, 1
    %p34 = por %p32, %p33
    %p35 = scmp.ne.s32.totalorder %s24, %s25
    %p36 = scmp.eq.s32.totalorder %s16, 0
    %p37 = por %p35, %p36
    %p38 = scmp.ne.s32.totalorder %s24, %s25
    %p39 = scmp.eq.s32.totalorder %s17, 1
    %p40 = por %p38, %p39
    %p42 = scmp.ne.s32.totalorder %s25, %s41
    %p43 = scmp.eq.s32.totalorder %s17, 0
    %p44 = por %p42, %p43
    %s46 = sadd.s32 %s45, 1
    %p49 = scmp.eq.s32.totalorder %s11, 1
    %p50 = scmp.ne.s32.totalorder %s45, %s47
    %p51 = scmp.eq.s32.totalorder %s11, 0
    %p52 = por %p50, %p51
    %p53 = scmp.ne.s32.totalorder %s45, %s47
    %p54 = scmp.eq.s32.totalorder %s16, 1
    %p55 = por %p53, %p54
    %p56 = scmp.ne.s32.totalorder %s47, %s48
    %p57 = scmp.eq.s32.totalorder %s16, 0
    %p58 = por %p56, %p57
    %p59 = scmp.ne.s32.totalorder %s47, %s48
    %p60 = scmp.eq.s32.totalorder %s17, 1
    %p61 = por %p59, %p60
    %p63 = scmp.ne.s32.totalorder %s48, %s62
    %p64 = scmp.eq.s32.totalorder %s17, 0
    %p65 = por %p63, %p64
    %s67 = sadd.s32 %s66, 1
    %p70 = scmp.eq.s32.totalorder %s11, 1
    %p71 = scmp.ne.s32.totalorder %s66, %s68
    %p72 = scmp.eq.s32.totalorder %s11, 0
    %p73 = por %p71, %p72
    %p74 = scmp.ne.s32.totalorder %s66, %s68
    %p75 = scmp.eq.s32.totalorder %s16, 1
    %p76 = por %p74, %p75
    %p77 = scmp.ne.s32.totalorder %s68, %s69
    %p78 = scmp.eq.s32.totalorder %s16, 0
    %p79 = por %p77, %p78
    %p80 = scmp.ne.s32.totalorder %s68, %s69
    %p81 = scmp.eq.s32.totalorder %s17, 1
    %p82 = por %p80, %p81
    %p84 = scmp.ne.s32.totalorder %s69, %s83
    %p85 = scmp.eq.s32.totalorder %s17, 0
    %p86 = por %p84, %p85
    %s88 = sadd.s32 %s87, 1
    %p91 = scmp.eq.s32.totalorder %s11, 1
    %p92 = scmp.ne.s32.totalorder %s87, %s89
    %p93 = scmp.eq.s32.totalorder %s11, 0
    %p94 = por %p92, %p93
    %p95 = scmp.ne.s32.totalorder %s87, %s89
    %p96 = scmp.eq.s32.totalorder %s16, 1
    %p97 = por %p95, %p96
    %p98 = scmp.ne.s32.totalorder %s89, %s90
    %p99 = scmp.eq.s32.totalorder %s16, 0
    %p100 = por %p98, %p99
    %p101 = scmp.ne.s32.totalorder %s89, %s90
    %p102 = scmp.eq.s32.totalorder %s17, 1
    %p103 = por %p101, %p102
    %p105 = scmp.ne.s32.totalorder %s90, %s104
    %p106 = scmp.eq.s32.totalorder %s17, 0
    %p107 = por %p105, %p106
    %s108 = ssub.s32 %s11, %s18
    %p109 = scmp.eq.s32.totalorder %s108, 0
    %s111 = sadd.s32 %s110, 1
    %s112 = scalar_select %p109, %s110, %s111
    %p115 = pneg %p109
    %p116 = scmp.eq.s32.totalorder %s11, 1
    %p117 = por %p115, %p116
    %p118 = scmp.ne.s32.totalorder %s110, %s113
    %p119 = scmp.eq.s32.totalorder %s11, 0
    %p120 = por %p118, %p119
    %p121 = scmp.ne.s32.totalorder %s110, %s113
    %p122 = scmp.eq.s32.totalorder %s16, 1
    %p123 = por %p121, %p122
    %p124 = scmp.ne.s32.totalorder %s113, %s114
    %p125 = scmp.eq.s32.totalorder %s16, 0
    %p126 = por %p124, %p125
    %p127 = scmp.ne.s32.totalorder %s113, %s114
    %p128 = scmp.eq.s32.totalorder %s17, 1
    %p129 = por %p127, %p128
    %p131 = scmp.ne.s32.totalorder %s114, %s130
    %p132 = scmp.eq.s32.totalorder %s17, 0
    %p133 = por %p131, %p132
    %s134 = ssub.s32 %s11, %s18
    %p135 = scmp.eq.s32.totalorder %s134, 0
    %s137 = sadd.s32 %s136, 1
    %s138 = scalar_select %p135, %s136, %s137
    %p141 = pneg %p135
    %p142 = scmp.eq.s32.totalorder %s11, 1
    %p143 = por %p141, %p142
    %p144 = scmp.ne.s32.totalorder %s136, %s139
    %p145 = scmp.eq.s32.totalorder %s11, 0
    %p146 = por %p144, %p145
    %p147 = scmp.ne.s32.totalorder %s136, %s139
    %p148 = scmp.eq.s32.totalorder %s16, 1
    %p149 = por %p147, %p148
    %p150 = scmp.ne.s32.totalorder %s139, %s140
    %p151 = scmp.eq.s32.totalorder %s16, 0
    %p152 = por %p150, %p151
    %p153 = scmp.ne.s32.totalorder %s139, %s140
    %p154 = scmp.eq.s32.totalorder %s17, 1
    %p155 = por %p153, %p154
    %p157 = scmp.ne.s32.totalorder %s140, %s156
    %p158 = scmp.eq.s32.totalorder %s17, 0
    %p159 = por %p157, %p158
    %p160 = scmp.le.s32.totalorder 1, %s11
    %p161 = scmp.lt.s32.totalorder %s11, 3
    %p162 = pnand %p160, %p161
    %p163 = pneg %p162
    // Predicated region
    $region9: #{bottleneck_forward.7} parent=5 // pred_check
      _
    $region10: #{bottleneck_forward.7} parent=5 // pred_check_branch
      %165 = sbr.rel (%p162) target = $region12
    $region11: #{bottleneck_forward.7} parent=5 // pred_region
      %s166 = ssub.s32 %s11, 1
      // Predicated region
      $region13: #{bottleneck_forward.7} parent=11 // pred_check
        %p167 = pneg %p58
      $region14: #{bottleneck_forward.7} parent=11 // pred_check_branch
        %169 = sbr.rel (%p167) target = $region16
      $region15: #{bottleneck_forward.7} parent=11 // pred_region
        _
      $region16: #{bottleneck_forward.7} parent=11 // pred_fallthru
        _
      // Predicated region
      $region17: #{bottleneck_forward.7} parent=11 // pred_check
        %p170 = pneg %p79
      $region18: #{bottleneck_forward.7} parent=11 // pred_check_branch
        %172 = sbr.rel (%p170) target = $region20
      $region19: #{bottleneck_forward.7} parent=11 // pred_region
        _
      $region20: #{bottleneck_forward.7} parent=11 // pred_fallthru
        _
      // Predicated region
      $region21: #{bottleneck_forward.7} parent=11 // pred_check
        %p173 = pneg %p100
      $region22: #{bottleneck_forward.7} parent=11 // pred_check_branch
        %175 = sbr.rel (%p173) target = $region24
      $region23: #{bottleneck_forward.7} parent=11 // pred_region
        _
      $region24: #{bottleneck_forward.7} parent=11 // pred_fallthru
        _
    $region12: #{bottleneck_forward.7} parent=5 // pred_fallthru
      _
    %p176 = scmp.lt.s32.totalorder %s11, 2
    // Predicated region
    $region25: #{bottleneck_forward.7} parent=5 // pred_check
      %p177 = pneg %p176
    $region26: #{bottleneck_forward.7} parent=5 // pred_check_branch
      %179 = sbr.rel (%p177) target = $region28
    $region27: #{bottleneck_forward.7} parent=5 // pred_region
      // Predicated region
      $region29: #{bottleneck_forward.7} parent=27 // pred_check
        %p180 = pneg %p31
      $region30: #{bottleneck_forward.7} parent=27 // pred_check_branch
        %182 = sbr.rel (%p180) target = $region32
      $region31: #{bottleneck_forward.7} parent=27 // pred_region
        %p183 = scmp.lt.s32.totalorder %s11, 1
        %s184 = scalar_select %p183, %s11, 1
        %s185 = smul.addr %s184, 4
        %s186 = smul.addr %s185, 8
        %s187 = scalar_lea.vmem %s0, %s186
      $region32: #{bottleneck_forward.7} parent=27 // pred_fallthru
        _
      // Predicated region
      $region33: #{bottleneck_forward.7} parent=27 // pred_check
        %p188 = pneg %p120
      $region34: #{bottleneck_forward.7} parent=27 // pred_check_branch
        %190 = sbr.rel (%p188) target = $region36
      $region35: #{bottleneck_forward.7} parent=27 // pred_region
        %p191 = scmp.lt.s32.totalorder %s11, 1
        %s192 = scalar_select %p191, %s11, 1
        %s193 = smul.addr %s192, 4
        %s194 = smul.addr %s193, 8
        %s195 = scalar_lea.vmem %s4, %s194
      $region36: #{bottleneck_forward.7} parent=27 // pred_fallthru
        _
    $region28: #{bottleneck_forward.7} parent=5 // pred_fallthru
      _
    %p196 = scmp.le.s32.totalorder 1, %s11
    %p197 = scmp.lt.s32.totalorder %s11, 3
    %p198 = pnand %p196, %p197
    %p199 = pneg %p198
    // Predicated region
    $region37: #{bottleneck_forward.7} parent=5 // pred_check
      _
    $region38: #{bottleneck_forward.7} parent=5 // pred_check_branch
      %201 = sbr.rel (%p198) target = $region40
    $region39: #{bottleneck_forward.7} parent=5 // pred_region
      %s202 = ssub.s32 %s11, 1
      %p203 = scmp.lt.s32.totalorder %s16, 1
      %s204 = scalar_select %p203, %s16, 1
      %s205 = smul.addr %s204, 4
      %s206 = smul.addr %s205, 8
      %s207 = scalar_lea.vmem %s0, %s206
      %p208 = pneg %p37
      %p209 = pneg %p34
      %p210 = pneg %p58
      %p211 = pneg %p55
      %p212 = pneg %p79
      %p213 = pneg %p76
      %p214 = pneg %p100
      %p215 = pneg %p97
      %p216 = scmp.lt.s32.totalorder %s16, 1
      %s217 = scalar_select %p216, %s16, 1
      %s218 = smul.addr %s217, 4
      %s219 = smul.addr %s218, 8
      %s220 = scalar_lea.vmem %s4, %s219
      %p221 = pneg %p126
      %p222 = pneg %p123
      %p223 = pneg %p152
      %p224 = pneg %p149
      %p225 = scmp.lt.s32.totalorder %s16, 1
      %s226 = scalar_select %p225, %s16, 1
      %s227 = smul.addr %s226, 4
      %s228 = smul.addr %s227, 8
      %s229 = scalar_lea.vmem %s5, %s228
      %p230 = scmp.lt.s32.totalorder %s16, 1
      %s231 = scalar_select %p230, %s16, 1
      %s232 = smul.addr %s231, 4
      %s233 = smul.addr %s232, 8
      %s234 = scalar_lea.vmem %s0, %s233
      %p235 = scmp.lt.s32.totalorder %s16, 1
      %s236 = scalar_select %p235, %s16, 1
      %s237 = smul.addr %s236, 4
      %s238 = smul.addr %s237, 8
      %s239 = scalar_lea.vmem %s4, %s238
      %p240 = scmp.lt.s32.totalorder %s16, 1
      %s241 = scalar_select %p240, %s16, 1
      %s242 = smul.addr %s241, 4
      %s243 = smul.addr %s242, 8
      %s244 = scalar_lea.vmem %s5, %s243
      %v245 = vld [vmem:[%s1] sm:$0xff]
      %v246 = vld [vmem:[%s1 + $0x8] sm:$0xff]
      %v247 = vld [vmem:[%s1 + $0x10] sm:$0xff]
      %v248 = vld [vmem:[%s1 + $0x18] sm:$0xff]
      %v249 = vld [vmem:[%s1 + $0x20] sm:$0xff]
      %v250 = vld [vmem:[%s1 + $0x28] sm:$0xff]
      %v251 = vld [vmem:[%s1 + $0x30] sm:$0xff]
      %v252 = vld [vmem:[%s1 + $0x38] sm:$0xff]
      %v253 = vld [vmem:[%s2] sm:$0xff]
      %v254 = vld [vmem:[%s2 + $0x8] sm:$0xff]
      %v255 = vld [vmem:[%s2 + $0x10] sm:$0xff]
      %v256 = vld [vmem:[%s2 + $0x18] sm:$0xff]
      %v257 = vld [vmem:[%s3] sm:$0xff]
      %v258 = vld [vmem:[%s3 + $0x8] sm:$0xff]
      %v259 = vld [vmem:[%s3 + $0x10] sm:$0xff]
      %v260 = vld [vmem:[%s3 + $0x18] sm:$0xff]
      %vm261 = vcmask 7168
      %v262 = vsel %vm261, %v245, 0.0
      %v263 = vsel %vm261, %v249, 0.0
      %v264 = vadd.f32 %v262, %v263
      %v265 = vsel %vm261, %v246, 0.0
      %v266 = vsel %vm261, %v250, 0.0
      %v267 = vadd.f32 %v265, %v266
      %v268 = vsel %vm261, %v247, 0.0
      %v269 = vsel %vm261, %v251, 0.0
      %v270 = vadd.f32 %v268, %v269
      %v271 = vsel %vm261, %v248, 0.0
      %v272 = vsel %vm261, %v252, 0.0
      %v273 = vadd.f32 %v271, %v272
      %v274 = vrcp.pop 2.0
      %v275 = vmul.f32 %v264, %v274
      %v276 = vmul.f32 %v267, %v274
      %v277 = vmul.f32 %v270, %v274
      %v278 = vmul.f32 %v273, %v274
      %vm279 = vcmask 15368
      %v280 = vsel %vm279, %v245, 0.0
      %v281 = vsel %vm279, %v249, 0.0
      %v282 = vadd.f32 %v280, %v281
      %v283 = vsel %vm279, %v246, 0.0
      %v284 = vsel %vm279, %v250, 0.0
      %v285 = vadd.f32 %v283, %v284
      %v286 = vsel %vm279, %v247, 0.0
      %v287 = vsel %vm279, %v251, 0.0
      %v288 = vadd.f32 %v286, %v287
      %v289 = vsel %vm279, %v248, 0.0
      %v290 = vsel %vm279, %v252, 0.0
      %v291 = vadd.f32 %v289, %v290
      %v292 = vsub.f32 %v245, %v275
      %v293 = vsub.f32 %v246, %v276
      %v294 = vsub.f32 %v247, %v277
      %v295 = vsub.f32 %v248, %v278
      %v296 = vsub.f32 %v249, %v275
      %v297 = vsub.f32 %v250, %v276
      %v298 = vsub.f32 %v251, %v277
      %v299 = vsub.f32 %v252, %v278
      %v300 = vmul.f32 %v292, %v292
      %v301 = vmul.f32 %v293, %v293
      %v302 = vmul.f32 %v294, %v294
      %v303 = vmul.f32 %v295, %v295
      %v304 = vmul.f32 %v296, %v296
      %v305 = vmul.f32 %v297, %v297
      %v306 = vmul.f32 %v298, %v298
      %v307 = vmul.f32 %v299, %v299
      %v308 = vsel %vm261, %v300, 0.0
      %v309 = vsel %vm261, %v304, 0.0
      %v310 = vadd.f32 %v308, %v309
      %v311 = vsel %vm261, %v301, 0.0
      %v312 = vsel %vm261, %v305, 0.0
      %v313 = vadd.f32 %v311, %v312
      %v314 = vsel %vm261, %v302, 0.0
      %v315 = vsel %vm261, %v306, 0.0
      %v316 = vadd.f32 %v314, %v315
      %v317 = vsel %vm261, %v303, 0.0
      %v318 = vsel %vm261, %v307, 0.0
      %v319 = vadd.f32 %v317, %v318
      %v320 = vmul.f32 %v310, 16.0
      %v321 = vmul.f32 %v313, 16.0
      %v322 = vmul.f32 %v316, 16.0
      %v323 = vmul.f32 %v319, 16.0
      %328 = vrot.lane.b32.xlu0 %v320, 1
      %v329 = vpop.permute.xlu0 %328
      %330 = vrot.lane.b32.xlu0 %v321, 1
      %v331 = vpop.permute.xlu0 %330
      %332 = vrot.lane.b32.xlu0 %v322, 1
      %v333 = vpop.permute.xlu0 %332
      %334 = vrot.lane.b32.xlu0 %v323, 1
      %v335 = vpop.permute.xlu0 %334
      %v340 = vadd.f32 %v282, %v329
      %v341 = vadd.f32 %v285, %v331
      %v342 = vadd.f32 %v288, %v333
      %v343 = vadd.f32 %v291, %v335
      %v344 = vmul.f32 %v340, 0.03125
      %v345 = vmul.f32 %v341, 0.03125
      %v346 = vmul.f32 %v342, 0.03125
      %v347 = vmul.f32 %v343, 0.03125
      %v348 = vadd.f32 %v344, 1e-05
      %v349 = vadd.f32 %v345, 1e-05
      %v350 = vadd.f32 %v346, 1e-05
      %v351 = vadd.f32 %v347, 1e-05
      %v352 = vrsqrt.pop %v348
      %v353 = vrsqrt.pop %v349
      %v354 = vrsqrt.pop %v350
      %v355 = vrsqrt.pop %v351
      %360 = vrot.lane.b32.xlu0 %v352, 127
      %v361 = vpop.permute.xlu0 %360
      %362 = vrot.lane.b32.xlu0 %v353, 127
      %v363 = vpop.permute.xlu0 %362
      %364 = vrot.lane.b32.xlu0 %v354, 127
      %v365 = vpop.permute.xlu0 %364
      %366 = vrot.lane.b32.xlu0 %v355, 127
      %v367 = vpop.permute.xlu0 %366
      %v372 = vmul.f32 %v253, %v361
      %v373 = vmul.f32 %v254, %v363
      %v374 = vmul.f32 %v255, %v365
      %v375 = vmul.f32 %v256, %v367
      %v376 = vmul.f32 %v275, %v372
      %v377 = vmul.f32 %v276, %v373
      %v378 = vmul.f32 %v277, %v374
      %v379 = vmul.f32 %v278, %v375
      %v380 = vsub.f32 %v257, %v376
      %v381 = vsub.f32 %v258, %v377
      %v382 = vsub.f32 %v259, %v378
      %v383 = vsub.f32 %v260, %v379
      %v384 = vld [vmem:[%s234] sm:$0xff]
      %v385 = vld [vmem:[%s234 + $0x8] sm:$0xff]
      %v386 = vld [vmem:[%s234 + $0x10] sm:$0xff]
      %v387 = vld [vmem:[%s234 + $0x18] sm:$0xff]
      %389 = vset.pattern.permute.xlu0 0
      %390 = vperm.xlu0 %389, %v372
      %v391 = vpop.permute.xlu0 %390
      %394 = vset.pattern.permute.xlu0 0
      %395 = vperm.xlu0 %394, %v373
      %v396 = vpop.permute.xlu0 %395
      %399 = vset.pattern.permute.xlu0 0
      %400 = vperm.xlu0 %399, %v374
      %v401 = vpop.permute.xlu0 %400
      %404 = vset.pattern.permute.xlu0 0
      %405 = vperm.xlu0 %404, %v375
      %v406 = vpop.permute.xlu0 %405
      %v408 = vmul.f32 %v384, %v391
      %v409 = vmul.f32 %v385, %v396
      %v410 = vmul.f32 %v386, %v401
      %v411 = vmul.f32 %v387, %v406
      %413 = vset.pattern.permute.xlu0 0
      %414 = vperm.xlu0 %413, %v380
      %v415 = vpop.permute.xlu0 %414
      %418 = vset.pattern.permute.xlu0 0
      %419 = vperm.xlu0 %418, %v381
      %v420 = vpop.permute.xlu0 %419
      %423 = vset.pattern.permute.xlu0 0
      %424 = vperm.xlu0 %423, %v382
      %v425 = vpop.permute.xlu0 %424
      %428 = vset.pattern.permute.xlu0 0
      %429 = vperm.xlu0 %428, %v383
      %v430 = vpop.permute.xlu0 %429
      %v432 = vadd.f32 %v408, %v415
      %v433 = vadd.f32 %v409, %v420
      %v434 = vadd.f32 %v410, %v425
      %v435 = vadd.f32 %v411, %v430
      %v436 = vld [vmem:[%s239] sm:$0xff]
      %v437 = vld [vmem:[%s239 + $0x8] sm:$0xff]
      %v438 = vld [vmem:[%s239 + $0x10] sm:$0xff]
      %v439 = vld [vmem:[%s239 + $0x18] sm:$0xff]
      %v440 = vadd.f32 %v432, %v436
      %v441 = vadd.f32 %v433, %v437
      %v442 = vadd.f32 %v434, %v438
      %v443 = vadd.f32 %v435, %v439
      %v444 = vmax.f32 %v440, 0.0
      %v445 = vmax.f32 %v441, 0.0
      %v446 = vmax.f32 %v442, 0.0
      %v447 = vmax.f32 %v443, 0.0
      %448 = vst [vmem:[%s244] sm:$0xff] %v444
      %449 = vst [vmem:[%s244 + $0x8] sm:$0xff] %v445
      %450 = vst [vmem:[%s244 + $0x10] sm:$0xff] %v446
      %451 = vst [vmem:[%s244 + $0x18] sm:$0xff] %v447
      %p452 = scmp.lt.s32.totalorder %s16, 1
      %s453 = scalar_select %p452, %s16, 1
      %s454 = smul.addr %s453, 4
      %s455 = smul.addr %s454, 8
      %s456 = scalar_lea.vmem %s5, %s455
      // Predicated region
      $region41: #{bottleneck_forward.7} parent=39 // pred_check
        %p457 = pneg %p149
      $region42: #{bottleneck_forward.7} parent=39 // pred_check_branch
        %459 = sbr.rel (%p457) target = $region44
      $region43: #{bottleneck_forward.7} parent=39 // pred_region
        _
      $region44: #{bottleneck_forward.7} parent=39 // pred_fallthru
        _
    $region40: #{bottleneck_forward.7} parent=5 // pred_fallthru
      _
    %p460 = scmp.le.s32.totalorder 2, %s11
    // Predicated region
    $region45: #{bottleneck_forward.7} parent=5 // pred_check
      %p461 = pneg %p460
    $region46: #{bottleneck_forward.7} parent=5 // pred_check_branch
      %463 = sbr.rel (%p461) target = $region48
    $region47: #{bottleneck_forward.7} parent=5 // pred_region
      %s464 = ssub.s32 %s11, 2
      // Predicated region
      $region49: #{bottleneck_forward.7} parent=47 // pred_check
        %p465 = pneg %p155
      $region50: #{bottleneck_forward.7} parent=47 // pred_check_branch
        %467 = sbr.rel (%p465) target = $region52
      $region51: #{bottleneck_forward.7} parent=47 // pred_region
        %p468 = scmp.lt.s32.totalorder %s17, 1
        %s469 = scalar_select %p468, %s17, 1
        %s470 = smul.addr %s469, 4
        %s471 = smul.addr %s470, 8
        %s472 = scalar_lea.vmem %s5, %s471
      $region52: #{bottleneck_forward.7} parent=47 // pred_fallthru
        _
    $region48: #{bottleneck_forward.7} parent=5 // pred_fallthru
      _
  $region6: #{bottleneck_forward.7} parent=0 // loop_footer
    %s15 = sadd.s32 1, %s11
  $region7: #{bottleneck_forward.7} parent=0 // loop_footer_branch
    %10 = sbr.rel target = $region3
  $region8: #{bottleneck_forward.7} parent=0 // loop_exit
    _

// kernel: bottleneck_forward.6
$region0: #{bottleneck_forward.6}
  #allocation0 [shape = 'u32[]', space=smem, size = 0x4, offset = 0x4, fixed_abs, tag = 'smem constant byte address 0x4 - core index']
  #allocation1 [shape = 'u32[144,128]{1,0:T(1,128)}', space=vmem, size = 0x12000, scoped, tag = 'internal scratch']
  %s0 = inlined_call_operand.vmem [shape: f32[2,8,128], index: 0, kind: input, shape index: {}]
  %s1 = inlined_call_operand.vmem [shape: f32[2,8,2], index: 1, kind: input, shape index: {}]
  %s2 = inlined_call_operand.vmem [shape: f32[8,1], index: 2, kind: input, shape index: {}]
  %s3 = inlined_call_operand.vmem [shape: f32[8,1], index: 3, kind: input, shape index: {}]
  %s4 = inlined_call_operand.vmem [shape: f32[32,8], index: 4, kind: input, shape index: {}]
  %s5 = inlined_call_operand.vmem [shape: f32[2,32,128], index: 5, kind: output, shape index: {0}]
  %s6 = inlined_call_operand.vmem [shape: f32[2,32,2], index: 6, kind: output, shape index: {1}]
  %7 = xla_tuple %s5, %s6
  %s8 = sld [smem:[#allocation0]]
  $region61: #{bottleneck_forward.6} parent=0
    _
  %s10 = ssub.s32 1, %s8
  %s11 = scalar_select 0, %s10, %s8
  loop: start=0, step=1, limit=4
  $region2: #{bottleneck_forward.6} parent=0 // loop_pre_header
    _
  $region3: #{bottleneck_forward.6} parent=0 // loop_header
    %s13 = sphi 0, %s17
    %p14 = scmp.ge.s32.totalorder %s13, 4
    %s23 = sphi 0, %s25
    %s26 = sphi 0, %s23
    %s27 = sphi 0, %s26
    %s43 = sphi 0, %s27
    %s47 = sphi 0, %s47
    %s49 = sphi 0, %s47
    %s50 = sphi 0, %s49
    %s64 = sphi 0, %s50
    %s68 = sphi 0, %s68
    %s70 = sphi 0, %s68
    %s71 = sphi 0, %s70
    %s85 = sphi 0, %s71
    %s89 = sphi 0, %s89
    %s91 = sphi 0, %s89
    %s92 = sphi 0, %s91
    %s106 = sphi 0, %s92
    %s110 = sphi 0, %s110
    %s112 = sphi 0, %s110
    %s113 = sphi 0, %s112
    %s127 = sphi 0, %s113
    %s133 = sphi 0, %s135
    %s136 = sphi 0, %s133
    %s137 = sphi 0, %s136
    %s153 = sphi 0, %s137
    %s159 = sphi 0, %s161
    %s162 = sphi 0, %s159
    %s163 = sphi 0, %s162
    %s179 = sphi 0, %s163
  $region4: #{bottleneck_forward.6} parent=0 // loop_header_branch
    %16 = sbr.rel (%p14) target = $region8
  $region5: #{bottleneck_forward.6} parent=0 // loop_body
    %s18 = ssub.s32 %s13, 1
    %s19 = ssub.s32 %s13, 2
    %s20 = sadd.s32 %s13, 1
    %s21 = ssub.s32 %s13, %s20
    %p22 = scmp.eq.s32.totalorder %s21, 0
    %s24 = sadd.s32 %s23, 1
    %s25 = scalar_select %p22, %s23, %s24
    %p28 = pneg %p22
    %p29 = scmp.eq.s32.totalorder %s13, 1
    %p30 = por %p28, %p29
    %p31 = scmp.ne.s32.totalorder %s23, %s26
    %p32 = scmp.eq.s32.totalorder %s13, 0
    %p33 = por %p31, %p32
    %p34 = scmp.ne.s32.totalorder %s23, %s26
    %p35 = scmp.eq.s32.totalorder %s18, 1
    %p36 = por %p34, %p35
    %p37 = scmp.ne.s32.totalorder %s26, %s27
    %p38 = scmp.eq.s32.totalorder %s18, 0
    %p39 = por %p37, %p38
    %p40 = scmp.ne.s32.totalorder %s26, %s27
    %p41 = scmp.eq.s32.totalorder %s19, 1
    %p42 = por %p40, %p41
    %p44 = scmp.ne.s32.totalorder %s27, %s43
    %p45 = scmp.eq.s32.totalorder %s19, 0
    %p46 = por %p44, %p45
    %s48 = sadd.s32 %s47, 1
    %p51 = scmp.eq.s32.totalorder %s13, 1
    %p52 = scmp.ne.s32.totalorder %s47, %s49
    %p53 = scmp.eq.s32.totalorder %s13, 0
    %p54 = por %p52, %p53
    %p55 = scmp.ne.s32.totalorder %s47, %s49
    %p56 = scmp.eq.s32.totalorder %s18, 1
    %p57 = por %p55, %p56
    %p58 = scmp.ne.s32.totalorder %s49, %s50
    %p59 = scmp.eq.s32.totalorder %s18, 0
    %p60 = por %p58, %p59
    %p61 = scmp.ne.s32.totalorder %s49, %s50
    %p62 = scmp.eq.s32.totalorder %s19, 1
    %p63 = por %p61, %p62
    %p65 = scmp.ne.s32.totalorder %s50, %s64
    %p66 = scmp.eq.s32.totalorder %s19, 0
    %p67 = por %p65, %p66
    %s69 = sadd.s32 %s68, 1
    %p72 = scmp.eq.s32.totalorder %s13, 1
    %p73 = scmp.ne.s32.totalorder %s68, %s70
    %p74 = scmp.eq.s32.totalorder %s13, 0
    %p75 = por %p73, %p74
    %p76 = scmp.ne.s32.totalorder %s68, %s70
    %p77 = scmp.eq.s32.totalorder %s18, 1
    %p78 = por %p76, %p77
    %p79 = scmp.ne.s32.totalorder %s70, %s71
    %p80 = scmp.eq.s32.totalorder %s18, 0
    %p81 = por %p79, %p80
    %p82 = scmp.ne.s32.totalorder %s70, %s71
    %p83 = scmp.eq.s32.totalorder %s19, 1
    %p84 = por %p82, %p83
    %p86 = scmp.ne.s32.totalorder %s71, %s85
    %p87 = scmp.eq.s32.totalorder %s19, 0
    %p88 = por %p86, %p87
    %s90 = sadd.s32 %s89, 1
    %p93 = scmp.eq.s32.totalorder %s13, 1
    %p94 = scmp.ne.s32.totalorder %s89, %s91
    %p95 = scmp.eq.s32.totalorder %s13, 0
    %p96 = por %p94, %p95
    %p97 = scmp.ne.s32.totalorder %s89, %s91
    %p98 = scmp.eq.s32.totalorder %s18, 1
    %p99 = por %p97, %p98
    %p100 = scmp.ne.s32.totalorder %s91, %s92
    %p101 = scmp.eq.s32.totalorder %s18, 0
    %p102 = por %p100, %p101
    %p103 = scmp.ne.s32.totalorder %s91, %s92
    %p104 = scmp.eq.s32.totalorder %s19, 1
    %p105 = por %p103, %p104
    %p107 = scmp.ne.s32.totalorder %s92, %s106
    %p108 = scmp.eq.s32.totalorder %s19, 0
    %p109 = por %p107, %p108
    %s111 = sadd.s32 %s110, 1
    %p114 = scmp.eq.s32.totalorder %s13, 1
    %p115 = scmp.ne.s32.totalorder %s110, %s112
    %p116 = scmp.eq.s32.totalorder %s13, 0
    %p117 = por %p115, %p116
    %p118 = scmp.ne.s32.totalorder %s110, %s112
    %p119 = scmp.eq.s32.totalorder %s18, 1
    %p120 = por %p118, %p119
    %p121 = scmp.ne.s32.totalorder %s112, %s113
    %p122 = scmp.eq.s32.totalorder %s18, 0
    %p123 = por %p121, %p122
    %p124 = scmp.ne.s32.totalorder %s112, %s113
    %p125 = scmp.eq.s32.totalorder %s19, 1
    %p126 = por %p124, %p125
    %p128 = scmp.ne.s32.totalorder %s113, %s127
    %p129 = scmp.eq.s32.totalorder %s19, 0
    %p130 = por %p128, %p129
    %s131 = ssub.s32 %s13, %s20
    %p132 = scmp.eq.s32.totalorder %s131, 0
    %s134 = sadd.s32 %s133, 1
    %s135 = scalar_select %p132, %s133, %s134
    %p138 = pneg %p132
    %p139 = scmp.eq.s32.totalorder %s13, 1
    %p140 = por %p138, %p139
    %p141 = scmp.ne.s32.totalorder %s133, %s136
    %p142 = scmp.eq.s32.totalorder %s13, 0
    %p143 = por %p141, %p142
    %p144 = scmp.ne.s32.totalorder %s133, %s136
    %p145 = scmp.eq.s32.totalorder %s18, 1
    %p146 = por %p144, %p145
    %p147 = scmp.ne.s32.totalorder %s136, %s137
    %p148 = scmp.eq.s32.totalorder %s18, 0
    %p149 = por %p147, %p148
    %p150 = scmp.ne.s32.totalorder %s136, %s137
    %p151 = scmp.eq.s32.totalorder %s19, 1
    %p152 = por %p150, %p151
    %p154 = scmp.ne.s32.totalorder %s137, %s153
    %p155 = scmp.eq.s32.totalorder %s19, 0
    %p156 = por %p154, %p155
    %s157 = ssub.s32 %s13, %s20
    %p158 = scmp.eq.s32.totalorder %s157, 0
    %s160 = sadd.s32 %s159, 1
    %s161 = scalar_select %p158, %s159, %s160
    %p164 = pneg %p158
    %p165 = scmp.eq.s32.totalorder %s13, 1
    %p166 = por %p164, %p165
    %p167 = scmp.ne.s32.totalorder %s159, %s162
    %p168 = scmp.eq.s32.totalorder %s13, 0
    %p169 = por %p167, %p168
    %p170 = scmp.ne.s32.totalorder %s159, %s162
    %p171 = scmp.eq.s32.totalorder %s18, 1
    %p172 = por %p170, %p171
    %p173 = scmp.ne.s32.totalorder %s162, %s163
    %p174 = scmp.eq.s32.totalorder %s18, 0
    %p175 = por %p173, %p174
    %p176 = scmp.ne.s32.totalorder %s162, %s163
    %p177 = scmp.eq.s32.totalorder %s19, 1
    %p178 = por %p176, %p177
    %p180 = scmp.ne.s32.totalorder %s163, %s179
    %p181 = scmp.eq.s32.totalorder %s19, 0
    %p182 = por %p180, %p181
    %p183 = scmp.le.s32.totalorder 1, %s13
    %p184 = scmp.lt.s32.totalorder %s13, 3
    %p185 = pnand %p183, %p184
    %p186 = pneg %p185
    // Predicated region
    $region9: #{bottleneck_forward.6} parent=5 // pred_check
      _
    $region10: #{bottleneck_forward.6} parent=5 // pred_check_branch
      %188 = sbr.rel (%p185) target = $region12
    $region11: #{bottleneck_forward.6} parent=5 // pred_region
      %s189 = ssub.s32 %s13, 1
      // Predicated region
      $region13: #{bottleneck_forward.6} parent=11 // pred_check
        %p190 = pneg %p60
      $region14: #{bottleneck_forward.6} parent=11 // pred_check_branch
        %192 = sbr.rel (%p190) target = $region16
      $region15: #{bottleneck_forward.6} parent=11 // pred_region
        _
      $region16: #{bottleneck_forward.6} parent=11 // pred_fallthru
        _
      // Predicated region
      $region17: #{bottleneck_forward.6} parent=11 // pred_check
        %p193 = pneg %p81
      $region18: #{bottleneck_forward.6} parent=11 // pred_check_branch
        %195 = sbr.rel (%p193) target = $region20
      $region19: #{bottleneck_forward.6} parent=11 // pred_region
        _
      $region20: #{bottleneck_forward.6} parent=11 // pred_fallthru
        _
      // Predicated region
      $region21: #{bottleneck_forward.6} parent=11 // pred_check
        %p196 = pneg %p102
      $region22: #{bottleneck_forward.6} parent=11 // pred_check_branch
        %198 = sbr.rel (%p196) target = $region24
      $region23: #{bottleneck_forward.6} parent=11 // pred_region
        _
      $region24: #{bottleneck_forward.6} parent=11 // pred_fallthru
        _
      // Predicated region
      $region25: #{bottleneck_forward.6} parent=11 // pred_check
        %p199 = pneg %p123
      $region26: #{bottleneck_forward.6} parent=11 // pred_check_branch
        %201 = sbr.rel (%p199) target = $region28
      $region27: #{bottleneck_forward.6} parent=11 // pred_region
        _
      $region28: #{bottleneck_forward.6} parent=11 // pred_fallthru
        _
    $region12: #{bottleneck_forward.6} parent=5 // pred_fallthru
      _
    %p202 = scmp.lt.s32.totalorder %s13, 2
    // Predicated region
    $region29: #{bottleneck_forward.6} parent=5 // pred_check
      %p203 = pneg %p202
    $region30: #{bottleneck_forward.6} parent=5 // pred_check_branch
      %205 = sbr.rel (%p203) target = $region32
    $region31: #{bottleneck_forward.6} parent=5 // pred_region
      // Predicated region
      $region33: #{bottleneck_forward.6} parent=31 // pred_check
        %p206 = pneg %p33
      $region34: #{bottleneck_forward.6} parent=31 // pred_check_branch
        %208 = sbr.rel (%p206) target = $region36
      $region35: #{bottleneck_forward.6} parent=31 // pred_region
        %p209 = scmp.lt.s32.totalorder %s13, 1
        %s210 = scalar_select %p209, %s13, 1
        %s211 = smul.addr %s210, 8
        %s212 = scalar_lea.vmem %s0, %s211
      $region36: #{bottleneck_forward.6} parent=31 // pred_fallthru
        _
    $region32: #{bottleneck_forward.6} parent=5 // pred_fallthru
      _
    %p213 = scmp.le.s32.totalorder 1, %s13
    %p214 = scmp.lt.s32.totalorder %s13, 3
    %p215 = pnand %p213, %p214
    %p216 = pneg %p215
    // Predicated region
    $region37: #{bottleneck_forward.6} parent=5 // pred_check
      _
    $region38: #{bottleneck_forward.6} parent=5 // pred_check_branch
      %218 = sbr.rel (%p215) target = $region40
    $region39: #{bottleneck_forward.6} parent=5 // pred_region
      %s219 = ssub.s32 %s13, 1
      %p220 = scmp.lt.s32.totalorder %s18, 1
      %s221 = scalar_select %p220, %s18, 1
      %s222 = smul.addr %s221, 8
      %s223 = scalar_lea.vmem %s0, %s222
      %p224 = pneg %p39
      %p225 = pneg %p36
      %p226 = pneg %p60
      %p227 = pneg %p57
      %p228 = pneg %p81
      %p229 = pneg %p78
      %p230 = pneg %p102
      %p231 = pneg %p99
      %p232 = pneg %p123
      %p233 = pneg %p120
      %p234 = pneg %p149
      %p235 = pneg %p146
      %p236 = scmp.lt.s32.totalorder %s18, 1
      %s237 = scalar_select %p236, %s18, 1
      %s238 = smul.addr %s237, 4
      %s239 = smul.addr %s238, 8
      %s240 = scalar_lea.vmem %s5, %s239
      %p241 = pneg %p175
      %p242 = pneg %p172
      %p243 = scmp.lt.s32.totalorder %s18, 1
      %s244 = scalar_select %p243, %s18, 1
      %s245 = smul.addr %s244, 4
      %s246 = smul.addr %s245, 8
      %s247 = scalar_lea.vmem %s6, %s246
      %p248 = scmp.lt.s32.totalorder %s18, 1
      %s249 = scalar_select %p248, %s18, 1
      %s250 = smul.addr %s249, 8
      %s251 = scalar_lea.vmem %s0, %s250
      %p252 = scmp.lt.s32.totalorder %s18, 1
      %s253 = scalar_select %p252, %s18, 1
      %s254 = smul.addr %s253, 4
      %s255 = smul.addr %s254, 8
      %s256 = scalar_lea.vmem %s5, %s255
      %p257 = scmp.lt.s32.totalorder %s18, 1
      %s258 = scalar_select %p257, %s18, 1
      %s259 = smul.addr %s258, 4
      %s260 = smul.addr %s259, 8
      %s261 = scalar_lea.vmem %s6, %s260
      %v262 = vlaneseq
      %v263 = vand.u32 %v262, 127
      %vm264 = vcmp.lt.s32.totalorder %v263, 16
      %v265 = vsel %vm264, 1, 0
      %v266 = vcvt.s32.f32 %v265
      %v267 = vld [vmem:[%s1] sm:$0xff]
      %v268 = vld [vmem:[%s1 + $0x8] sm:$0xff]
      %v269 = vld [vmem:[%s2] sm:$0xff]
      %v270 = vld [vmem:[%s3] sm:$0xff]
      %vm271 = vcmask 7168
      %v272 = vsel %vm271, %v267, 0.0
      %v273 = vsel %vm271, %v268, 0.0
      %v274 = vadd.f32 %v272, %v273
      %v275 = vrcp.pop 2.0
      %v276 = vmul.f32 %v274, %v275
      %vm277 = vcmask 15368
      %v278 = vsel %vm277, %v267, 0.0
      %v279 = vsel %vm277, %v268, 0.0
      %v280 = vadd.f32 %v278, %v279
      %v281 = vsub.f32 %v267, %v276
      %v282 = vsub.f32 %v268, %v276
      %v283 = vmul.f32 %v281, %v281
      %v284 = vmul.f32 %v282, %v282
      %v285 = vsel %vm271, %v283, 0.0
      %v286 = vsel %vm271, %v284, 0.0
      %v287 = vadd.f32 %v285, %v286
      %v288 = vmul.f32 %v287, 16.0
      %290 = vrot.lane.b32.xlu0 %v288, 1
      %v291 = vpop.permute.xlu0 %290
      %v293 = vadd.f32 %v280, %v291
      %v294 = vmul.f32 %v293, 0.03125
      %v295 = vadd.f32 %v294, 1e-05
      %v296 = vrsqrt.pop %v295
      %298 = vrot.lane.b32.xlu0 %v296, 127
      %v299 = vpop.permute.xlu0 %298
      %v301 = vmul.f32 %v269, %v299
      %v302 = vmul.f32 %v276, %v301
      %v303 = vsub.f32 %v270, %v302
      %v304 = vld [vmem:[%s4] sm:$0xff]
      %v305 = vld [vmem:[%s4 + $0x8] sm:$0xff]
      %v306 = vld [vmem:[%s4 + $0x10] sm:$0xff]
      %v307 = vld [vmem:[%s4 + $0x18] sm:$0xff]
      %v308 = vld [vmem:[%s251] sm:$0xff]
      %310 = vset.pattern.permute.xlu0 0
      %311 = vperm.xlu0 %310, %v301
      %v312 = vpop.permute.xlu0 %311
      %v314 = vmul.f32 %v308, %v312
      %316 = vset.pattern.permute.xlu0 0
      %317 = vperm.xlu0 %316, %v303
      %v318 = vpop.permute.xlu0 %317
      %v320 = vadd.f32 %v314, %v318
      %v321 = vmax.f32 %v320, 0.0
      %v322 = vmul.f32 %v321, %v266
      %vm323 = vcmask 64512
      %v325 = vsel %vm323, %v304, 0
      %v328 = vsel %vm323, %v305, 0
      %v331 = vsel %vm323, %v306, 0
      %v334 = vsel %vm323, %v307, 0
      %336 = vmatprep.subr.mxu0 0.0
      %337 = vmatpush1.msra.mxu0 %v322
      %338 = vmatprep.subr.mxu0 0.0
      %339 = vmatpush1.msra.mxu0 0.0
      %340 = vmatprep.subr.mxu0 0.0
      %341 = vmatpush1.msra.mxu0 0.0
      %342 = vmatprep.subr.mxu0 0.0
      %343 = vmatpush1.msra.mxu0 0.0
      %344 = vmatprep.subr.mxu0 0.0
      %345 = vmatpush1.msra.mxu0 0.0
      %346 = vmatprep.subr.mxu0 0.0
      %347 = vmatpush1.msra.mxu0 0.0
      %348 = vmatprep.subr.mxu0 0.0
      %349 = vmatpush1.msra.mxu0 0.0
      %350 = vmatprep.subr.mxu0 0.0
      %351 = vmatpush1.msra.mxu0 0.0
      %352 = vmatprep.subr.mxu0 0.0
      %353 = vmatpush1.msra.mxu0 0.0
      %354 = vmatprep.subr.mxu0 0.0
      %355 = vmatpush1.msra.mxu0 0.0
      %356 = vmatprep.subr.mxu0 0.0
      %357 = vmatpush1.msra.mxu0 0.0
      %358 = vmatprep.subr.mxu0 0.0
      %359 = vmatpush1.msra.mxu0 0.0
      %360 = vmatprep.subr.mxu0 0.0
      %361 = vmatpush1.msra.mxu0 0.0
      %362 = vmatprep.subr.mxu0 0.0
      %363 = vmatpush1.msra.mxu0 0.0
      %364 = vmatprep.subr.mxu0 0.0
      %365 = vmatpush1.msra.mxu0 0.0
      %366 = vmatprep.subr.mxu0 0.0
      %367 = vmatpush1.msra.mxu0 0.0
      %368 = vmatprep.subr.mxu0 0.0
      %369 = vmatpush1.msra.mxu0 0.0
      %370 = vmatprep.subr.mxu0 0.0
      %371 = vmatpush1.msra.mxu0 0.0
      %372 = vmatprep.subr.mxu0 0.0
      %373 = vmatpush1.msra.mxu0 0.0
      %374 = vmatprep.subr.mxu0 0.0
      %375 = vmatpush1.msra.mxu0 0.0
      %376 = vmatprep.subr.mxu0 0.0
      %377 = vmatpush1.msra.mxu0 0.0
      %378 = vmatprep.subr.mxu0 0.0
      %379 = vmatpush1.msra.mxu0 0.0
      %380 = vmatprep.subr.mxu0 0.0
      %381 = vmatpush1.msra.mxu0 0.0
      %382 = vmatprep.subr.mxu0 0.0
      %383 = vmatpush1.msra.mxu0 0.0
      %384 = vmatprep.subr.mxu0 0.0
      %385 = vmatpush1.msra.mxu0 0.0
      %386 = vmatprep.subr.mxu0 0.0
      %387 = vmatpush1.msra.mxu0 0.0
      %388 = vmatprep.subr.mxu0 0.0
      %389 = vmatpush1.msra.mxu0 0.0
      %390 = vmatprep.subr.mxu0 0.0
      %391 = vmatpush1.msra.mxu0 0.0
      %392 = vmatprep.subr.mxu0 0.0
      %393 = vmatpush1.msra.mxu0 0.0
      %394 = vmatprep.subr.mxu0 0.0
      %395 = vmatpush1.msra.mxu0 0.0
      %396 = vmatprep.subr.mxu0 0.0
      %397 = vmatpush1.msra.mxu0 0.0
      %398 = vmatprep.subr.mxu0 0.0
      %399 = vmatpush1.msra.mxu0 0.0
      %400 = vmatprep.mubr.f32.mxu0 0.0
      %401 = vmatmul.mubr.f32.gmra.mrb[0].mxu0 %v325
      %v402 = vpop.f32.mrb[0].mxu0
      %v403 = vadd.f32 0.0, %v402
      %v404 = vpop.f32.mrb[0].mxu0
      %405 = vmatprep.mubr.f32.mxu0 0.0
      %406 = vmatmul.mubr.f32.gmra.mrb[0].mxu0 %v328
      %v407 = vpop.f32.mrb[0].mxu0
      %v408 = vadd.f32 0.0, %v407
      %v409 = vpop.f32.mrb[0].mxu0
      %410 = vmatprep.mubr.f32.mxu0 0.0
      %411 = vmatmul.mubr.f32.gmra.mrb[0].mxu0 %v331
      %v412 = vpop.f32.mrb[0].mxu0
      %v413 = vadd.f32 0.0, %v412
      %v414 = vpop.f32.mrb[0].mxu0
      %415 = vmatprep.mubr.f32.mxu0 0.0
      %416 = vmatmul.mubr.f32.gmra.mrb[0].mxu0 %v334
      %v417 = vpop.f32.mrb[0].mxu0
      %v418 = vadd.f32 0.0, %v417
      %v419 = vpop.f32.mrb[0].mxu0
      %420 = vdwg.mxu0
      %421 = vadd.xlane.f32.xlu0 %v403
      %v422 = vpop.xlane.xlu0 %421
      %423 = vadd.xlane.f32.xlu0 %v408
      %v424 = vpop.xlane.xlu0 %423
      %425 = vadd.xlane.f32.xlu0 %v413
      %v426 = vpop.xlane.xlu0 %425
      %427 = vadd.xlane.f32.xlu0 %v418
      %v428 = vpop.xlane.xlu0 %427
      %v429 = vmul.f32 %v422, 0.0625
      %v430 = vmul.f32 %v424, 0.0625
      %v431 = vmul.f32 %v426, 0.0625
      %v432 = vmul.f32 %v428, 0.0625
      %v433 = vsub.f32 %v403, %v429
      %v434 = vsub.f32 %v408, %v430
      %v435 = vsub.f32 %v413, %v431
      %v436 = vsub.f32 %v418, %v432
      %v437 = vmul.f32 %v433, %v433
      %v438 = vmul.f32 %v434, %v434
      %v439 = vmul.f32 %v435, %v435
      %v440 = vmul.f32 %v436, %v436
      %v441 = vmul.f32 %v266, %v437
      %v442 = vmul.f32 %v266, %v438
      %v443 = vmul.f32 %v266, %v439
      %v444 = vmul.f32 %v266, %v440
      %445 = vadd.xlane.f32.xlu0 %v441
      %v446 = vpop.xlane.xlu0 %445
      %447 = vadd.xlane.f32.xlu0 %v442
      %v448 = vpop.xlane.xlu0 %447
      %449 = vadd.xlane.f32.xlu0 %v443
      %v450 = vpop.xlane.xlu0 %449
      %451 = vadd.xlane.f32.xlu0 %v444
      %v452 = vpop.xlane.xlu0 %451
      %v453 = vsel %vm271, %v429, %v446
      %v454 = vsel %vm271, %v430, %v448
      %v455 = vsel %vm271, %v431, %v450
      %v456 = vsel %vm271, %v432, %v452
      %vm457 = vcmask 15360
      %458 = vst.msk [vmem:[%s261] sm:$0xff] %vm457, %v453
      %459 = vst.msk [vmem:[%s261 + $0x8] sm:$0xff] %vm457, %v454
      %460 = vst.msk [vmem:[%s261 + $0x10] sm:$0xff] %vm457, %v455
      %461 = vst.msk [vmem:[%s261 + $0x18] sm:$0xff] %vm457, %v456
      %462 = vst [vmem:[%s256] sm:$0xff] %v403
      %463 = vst [vmem:[%s256 + $0x8] sm:$0xff] %v408
      %464 = vst [vmem:[%s256 + $0x10] sm:$0xff] %v413
      %465 = vst [vmem:[%s256 + $0x18] sm:$0xff] %v418
      %p466 = scmp.lt.s32.totalorder %s18, 1
      %s467 = scalar_select %p466, %s18, 1
      %s468 = smul.addr %s467, 4
      %s469 = smul.addr %s468, 8
      %s470 = scalar_lea.vmem %s5, %s469
      %p471 = scmp.lt.s32.totalorder %s18, 1
      %s472 = scalar_select %p471, %s18, 1
      %s473 = smul.addr %s472, 4
      %s474 = smul.addr %s473, 8
      %s475 = scalar_lea.vmem %s6, %s474
      // Predicated region
      $region41: #{bottleneck_forward.6} parent=39 // pred_check
        %p476 = pneg %p146
      $region42: #{bottleneck_forward.6} parent=39 // pred_check_branch
        %478 = sbr.rel (%p476) target = $region44
      $region43: #{bottleneck_forward.6} parent=39 // pred_region
        _
      $region44: #{bottleneck_forward.6} parent=39 // pred_fallthru
        _
      // Predicated region
      $region45: #{bottleneck_forward.6} parent=39 // pred_check
        %p479 = pneg %p172
      $region46: #{bottleneck_forward.6} parent=39 // pred_check_branch
        %481 = sbr.rel (%p479) target = $region48
      $region47: #{bottleneck_forward.6} parent=39 // pred_region
        _
      $region48: #{bottleneck_forward.6} parent=39 // pred_fallthru
        _
    $region40: #{bottleneck_forward.6} parent=5 // pred_fallthru
      _
    %p482 = scmp.le.s32.totalorder 2, %s13
    // Predicated region
    $region49: #{bottleneck_forward.6} parent=5 // pred_check
      %p483 = pneg %p482
    $region50: #{bottleneck_forward.6} parent=5 // pred_check_branch
      %485 = sbr.rel (%p483) target = $region52
    $region51: #{bottleneck_forward.6} parent=5 // pred_region
      %s486 = ssub.s32 %s13, 2
      // Predicated region
      $region53: #{bottleneck_forward.6} parent=51 // pred_check
        %p487 = pneg %p152
      $region54: #{bottleneck_forward.6} parent=51 // pred_check_branch
        %489 = sbr.rel (%p487) target = $region56
      $region55: #{bottleneck_forward.6} parent=51 // pred_region
        %p490 = scmp.lt.s32.totalorder %s19, 1
        %s491 = scalar_select %p490, %s19, 1
        %s492 = smul.addr %s491, 4
        %s493 = smul.addr %s492, 8
        %s494 = scalar_lea.vmem %s5, %s493
      $region56: #{bottleneck_forward.6} parent=51 // pred_fallthru
        _
      // Predicated region
      $region57: #{bottleneck_forward.6} parent=51 // pred_check
        %p495 = pneg %p178
      $region58: #{bottleneck_forward.6} parent=51 // pred_check_branch
        %497 = sbr.rel (%p495) target = $region60
      $region59: #{bottleneck_forward.6} parent=51 // pred_region
        %p498 = scmp.lt.s32.totalorder %s19, 1
        %s499 = scalar_select %p498, %s19, 1
        %s500 = smul.addr %s499, 4
        %s501 = smul.addr %s500, 8
        %s502 = scalar_lea.vmem %s6, %s501
      $region60: #{bottleneck_forward.6} parent=51 // pred_fallthru
        _
    $region52: #{bottleneck_forward.6} parent=5 // pred_fallthru
      _
  $region6: #{bottleneck_forward.6} parent=0 // loop_footer
    %s17 = sadd.s32 1, %s13
  $region7: #{bottleneck_forward.6} parent=0 // loop_footer_branch
    %12 = sbr.rel target = $region3
  $region8: #{bottleneck_forward.6} parent=0 // loop_exit
    _

// kernel: bottleneck_forward.5
$region0: #{bottleneck_forward.5}
  #allocation0 [shape = 'u32[]', space=smem, size = 0x4, offset = 0x4, fixed_abs, tag = 'smem constant byte address 0x4 - core index']
  #allocation1 [shape = 'u32[144,128]{1,0:T(1,128)}', space=vmem, size = 0x12000, scoped, tag = 'internal scratch']
  %s0 = inlined_call_operand.vmem [shape: f32[2,8,128], index: 0, kind: input, shape index: {}]
  %s1 = inlined_call_operand.vmem [shape: f32[2,8,2], index: 1, kind: input, shape index: {}]
  %s2 = inlined_call_operand.vmem [shape: f32[8,1], index: 2, kind: input, shape index: {}]
  %s3 = inlined_call_operand.vmem [shape: f32[8,1], index: 3, kind: input, shape index: {}]
  %s4 = inlined_call_operand.vmem [shape: f32[3,8,8], index: 4, kind: input, shape index: {}]
  %s5 = inlined_call_operand.vmem [shape: f32[2,8,128], index: 5, kind: output, shape index: {0}]
  %s6 = inlined_call_operand.vmem [shape: f32[2,8,2], index: 6, kind: output, shape index: {1}]
  %7 = xla_tuple %s5, %s6
  %s8 = sld [smem:[#allocation0]]
  $region61: #{bottleneck_forward.5} parent=0
    _
  %s10 = ssub.s32 1, %s8
  %s11 = scalar_select 0, %s10, %s8
  loop: start=0, step=1, limit=4
  $region2: #{bottleneck_forward.5} parent=0 // loop_pre_header
    _
  $region3: #{bottleneck_forward.5} parent=0 // loop_header
    %s13 = sphi 0, %s17
    %p14 = scmp.ge.s32.totalorder %s13, 4
    %s23 = sphi 0, %s25
    %s26 = sphi 0, %s23
    %s27 = sphi 0, %s26
    %s43 = sphi 0, %s27
    %s47 = sphi 0, %s47
    %s49 = sphi 0, %s47
    %s50 = sphi 0, %s49
    %s64 = sphi 0, %s50
    %s68 = sphi 0, %s68
    %s70 = sphi 0, %s68
    %s71 = sphi 0, %s70
    %s85 = sphi 0, %s71
    %s89 = sphi 0, %s89
    %s91 = sphi 0, %s89
    %s92 = sphi 0, %s91
    %s106 = sphi 0, %s92
    %s110 = sphi 0, %s110
    %s112 = sphi 0, %s110
    %s113 = sphi 0, %s112
    %s127 = sphi 0, %s113
    %s133 = sphi 0, %s135
    %s136 = sphi 0, %s133
    %s137 = sphi 0, %s136
    %s153 = sphi 0, %s137
    %s159 = sphi 0, %s161
    %s162 = sphi 0, %s159
    %s163 = sphi 0, %s162
    %s179 = sphi 0, %s163
  $region4: #{bottleneck_forward.5} parent=0 // loop_header_branch
    %16 = sbr.rel (%p14) target = $region8
  $region5: #{bottleneck_forward.5} parent=0 // loop_body
    %s18 = ssub.s32 %s13, 1
    %s19 = ssub.s32 %s13, 2
    %s20 = sadd.s32 %s13, 1
    %s21 = ssub.s32 %s13, %s20
    %p22 = scmp.eq.s32.totalorder %s21, 0
    %s24 = sadd.s32 %s23, 1
    %s25 = scalar_select %p22, %s23, %s24
    %p28 = pneg %p22
    %p29 = scmp.eq.s32.totalorder %s13, 1
    %p30 = por %p28, %p29
    %p31 = scmp.ne.s32.totalorder %s23, %s26
    %p32 = scmp.eq.s32.totalorder %s13, 0
    %p33 = por %p31, %p32
    %p34 = scmp.ne.s32.totalorder %s23, %s26
    %p35 = scmp.eq.s32.totalorder %s18, 1
    %p36 = por %p34, %p35
    %p37 = scmp.ne.s32.totalorder %s26, %s27
    %p38 = scmp.eq.s32.totalorder %s18, 0
    %p39 = por %p37, %p38
    %p40 = scmp.ne.s32.totalorder %s26, %s27
    %p41 = scmp.eq.s32.totalorder %s19, 1
    %p42 = por %p40, %p41
    %p44 = scmp.ne.s32.totalorder %s27, %s43
    %p45 = scmp.eq.s32.totalorder %s19, 0
    %p46 = por %p44, %p45
    %s48 = sadd.s32 %s47, 1
    %p51 = scmp.eq.s32.totalorder %s13, 1
    %p52 = scmp.ne.s32.totalorder %s47, %s49
    %p53 = scmp.eq.s32.totalorder %s13, 0
    %p54 = por %p52, %p53
    %p55 = scmp.ne.s32.totalorder %s47, %s49
    %p56 = scmp.eq.s32.totalorder %s18, 1
    %p57 = por %p55, %p56
    %p58 = scmp.ne.s32.totalorder %s49, %s50
    %p59 = scmp.eq.s32.totalorder %s18, 0
    %p60 = por %p58, %p59
    %p61 = scmp.ne.s32.totalorder %s49, %s50
    %p62 = scmp.eq.s32.totalorder %s19, 1
    %p63 = por %p61, %p62
    %p65 = scmp.ne.s32.totalorder %s50, %s64
    %p66 = scmp.eq.s32.totalorder %s19, 0
    %p67 = por %p65, %p66
    %s69 = sadd.s32 %s68, 1
    %p72 = scmp.eq.s32.totalorder %s13, 1
    %p73 = scmp.ne.s32.totalorder %s68, %s70
    %p74 = scmp.eq.s32.totalorder %s13, 0
    %p75 = por %p73, %p74
    %p76 = scmp.ne.s32.totalorder %s68, %s70
    %p77 = scmp.eq.s32.totalorder %s18, 1
    %p78 = por %p76, %p77
    %p79 = scmp.ne.s32.totalorder %s70, %s71
    %p80 = scmp.eq.s32.totalorder %s18, 0
    %p81 = por %p79, %p80
    %p82 = scmp.ne.s32.totalorder %s70, %s71
    %p83 = scmp.eq.s32.totalorder %s19, 1
    %p84 = por %p82, %p83
    %p86 = scmp.ne.s32.totalorder %s71, %s85
    %p87 = scmp.eq.s32.totalorder %s19, 0
    %p88 = por %p86, %p87
    %s90 = sadd.s32 %s89, 1
    %p93 = scmp.eq.s32.totalorder %s13, 1
    %p94 = scmp.ne.s32.totalorder %s89, %s91
    %p95 = scmp.eq.s32.totalorder %s13, 0
    %p96 = por %p94, %p95
    %p97 = scmp.ne.s32.totalorder %s89, %s91
    %p98 = scmp.eq.s32.totalorder %s18, 1
    %p99 = por %p97, %p98
    %p100 = scmp.ne.s32.totalorder %s91, %s92
    %p101 = scmp.eq.s32.totalorder %s18, 0
    %p102 = por %p100, %p101
    %p103 = scmp.ne.s32.totalorder %s91, %s92
    %p104 = scmp.eq.s32.totalorder %s19, 1
    %p105 = por %p103, %p104
    %p107 = scmp.ne.s32.totalorder %s92, %s106
    %p108 = scmp.eq.s32.totalorder %s19, 0
    %p109 = por %p107, %p108
    %s111 = sadd.s32 %s110, 1
    %p114 = scmp.eq.s32.totalorder %s13, 1
    %p115 = scmp.ne.s32.totalorder %s110, %s112
    %p116 = scmp.eq.s32.totalorder %s13, 0
    %p117 = por %p115, %p116
    %p118 = scmp.ne.s32.totalorder %s110, %s112
    %p119 = scmp.eq.s32.totalorder %s18, 1
    %p120 = por %p118, %p119
    %p121 = scmp.ne.s32.totalorder %s112, %s113
    %p122 = scmp.eq.s32.totalorder %s18, 0
    %p123 = por %p121, %p122
    %p124 = scmp.ne.s32.totalorder %s112, %s113
    %p125 = scmp.eq.s32.totalorder %s19, 1
    %p126 = por %p124, %p125
    %p128 = scmp.ne.s32.totalorder %s113, %s127
    %p129 = scmp.eq.s32.totalorder %s19, 0
    %p130 = por %p128, %p129
    %s131 = ssub.s32 %s13, %s20
    %p132 = scmp.eq.s32.totalorder %s131, 0
    %s134 = sadd.s32 %s133, 1
    %s135 = scalar_select %p132, %s133, %s134
    %p138 = pneg %p132
    %p139 = scmp.eq.s32.totalorder %s13, 1
    %p140 = por %p138, %p139
    %p141 = scmp.ne.s32.totalorder %s133, %s136
    %p142 = scmp.eq.s32.totalorder %s13, 0
    %p143 = por %p141, %p142
    %p144 = scmp.ne.s32.totalorder %s133, %s136
    %p145 = scmp.eq.s32.totalorder %s18, 1
    %p146 = por %p144, %p145
    %p147 = scmp.ne.s32.totalorder %s136, %s137
    %p148 = scmp.eq.s32.totalorder %s18, 0
    %p149 = por %p147, %p148
    %p150 = scmp.ne.s32.totalorder %s136, %s137
    %p151 = scmp.eq.s32.totalorder %s19, 1
    %p152 = por %p150, %p151
    %p154 = scmp.ne.s32.totalorder %s137, %s153
    %p155 = scmp.eq.s32.totalorder %s19, 0
    %p156 = por %p154, %p155
    %s157 = ssub.s32 %s13, %s20
    %p158 = scmp.eq.s32.totalorder %s157, 0
    %s160 = sadd.s32 %s159, 1
    %s161 = scalar_select %p158, %s159, %s160
    %p164 = pneg %p158
    %p165 = scmp.eq.s32.totalorder %s13, 1
    %p166 = por %p164, %p165
    %p167 = scmp.ne.s32.totalorder %s159, %s162
    %p168 = scmp.eq.s32.totalorder %s13, 0
    %p169 = por %p167, %p168
    %p170 = scmp.ne.s32.totalorder %s159, %s162
    %p171 = scmp.eq.s32.totalorder %s18, 1
    %p172 = por %p170, %p171
    %p173 = scmp.ne.s32.totalorder %s162, %s163
    %p174 = scmp.eq.s32.totalorder %s18, 0
    %p175 = por %p173, %p174
    %p176 = scmp.ne.s32.totalorder %s162, %s163
    %p177 = scmp.eq.s32.totalorder %s19, 1
    %p178 = por %p176, %p177
    %p180 = scmp.ne.s32.totalorder %s163, %s179
    %p181 = scmp.eq.s32.totalorder %s19, 0
    %p182 = por %p180, %p181
    %p183 = scmp.le.s32.totalorder 1, %s13
    %p184 = scmp.lt.s32.totalorder %s13, 3
    %p185 = pnand %p183, %p184
    %p186 = pneg %p185
    // Predicated region
    $region9: #{bottleneck_forward.5} parent=5 // pred_check
      _
    $region10: #{bottleneck_forward.5} parent=5 // pred_check_branch
      %188 = sbr.rel (%p185) target = $region12
    $region11: #{bottleneck_forward.5} parent=5 // pred_region
      %s189 = ssub.s32 %s13, 1
      // Predicated region
      $region13: #{bottleneck_forward.5} parent=11 // pred_check
        %p190 = pneg %p60
      $region14: #{bottleneck_forward.5} parent=11 // pred_check_branch
        %192 = sbr.rel (%p190) target = $region16
      $region15: #{bottleneck_forward.5} parent=11 // pred_region
        _
      $region16: #{bottleneck_forward.5} parent=11 // pred_fallthru
        _
      // Predicated region
      $region17: #{bottleneck_forward.5} parent=11 // pred_check
        %p193 = pneg %p81
      $region18: #{bottleneck_forward.5} parent=11 // pred_check_branch
        %195 = sbr.rel (%p193) target = $region20
      $region19: #{bottleneck_forward.5} parent=11 // pred_region
        _
      $region20: #{bottleneck_forward.5} parent=11 // pred_fallthru
        _
      // Predicated region
      $region21: #{bottleneck_forward.5} parent=11 // pred_check
        %p196 = pneg %p102
      $region22: #{bottleneck_forward.5} parent=11 // pred_check_branch
        %198 = sbr.rel (%p196) target = $region24
      $region23: #{bottleneck_forward.5} parent=11 // pred_region
        _
      $region24: #{bottleneck_forward.5} parent=11 // pred_fallthru
        _
      // Predicated region
      $region25: #{bottleneck_forward.5} parent=11 // pred_check
        %p199 = pneg %p123
      $region26: #{bottleneck_forward.5} parent=11 // pred_check_branch
        %201 = sbr.rel (%p199) target = $region28
      $region27: #{bottleneck_forward.5} parent=11 // pred_region
        _
      $region28: #{bottleneck_forward.5} parent=11 // pred_fallthru
        _
    $region12: #{bottleneck_forward.5} parent=5 // pred_fallthru
      _
    %p202 = scmp.lt.s32.totalorder %s13, 2
    // Predicated region
    $region29: #{bottleneck_forward.5} parent=5 // pred_check
      %p203 = pneg %p202
    $region30: #{bottleneck_forward.5} parent=5 // pred_check_branch
      %205 = sbr.rel (%p203) target = $region32
    $region31: #{bottleneck_forward.5} parent=5 // pred_region
      // Predicated region
      $region33: #{bottleneck_forward.5} parent=31 // pred_check
        %p206 = pneg %p33
      $region34: #{bottleneck_forward.5} parent=31 // pred_check_branch
        %208 = sbr.rel (%p206) target = $region36
      $region35: #{bottleneck_forward.5} parent=31 // pred_region
        %p209 = scmp.lt.s32.totalorder %s13, 1
        %s210 = scalar_select %p209, %s13, 1
        %s211 = smul.addr %s210, 8
        %s212 = scalar_lea.vmem %s0, %s211
      $region36: #{bottleneck_forward.5} parent=31 // pred_fallthru
        _
    $region32: #{bottleneck_forward.5} parent=5 // pred_fallthru
      _
    %p213 = scmp.le.s32.totalorder 1, %s13
    %p214 = scmp.lt.s32.totalorder %s13, 3
    %p215 = pnand %p213, %p214
    %p216 = pneg %p215
    // Predicated region
    $region37: #{bottleneck_forward.5} parent=5 // pred_check
      _
    $region38: #{bottleneck_forward.5} parent=5 // pred_check_branch
      %218 = sbr.rel (%p215) target = $region40
    $region39: #{bottleneck_forward.5} parent=5 // pred_region
      %s219 = ssub.s32 %s13, 1
      %p220 = scmp.lt.s32.totalorder %s18, 1
      %s221 = scalar_select %p220, %s18, 1
      %s222 = smul.addr %s221, 8
      %s223 = scalar_lea.vmem %s0, %s222
      %p224 = pneg %p39
      %p225 = pneg %p36
      %p226 = pneg %p60
      %p227 = pneg %p57
      %p228 = pneg %p81
      %p229 = pneg %p78
      %p230 = pneg %p102
      %p231 = pneg %p99
      %p232 = pneg %p123
      %p233 = pneg %p120
      %p234 = pneg %p149
      %p235 = pneg %p146
      %p236 = scmp.lt.s32.totalorder %s18, 1
      %s237 = scalar_select %p236, %s18, 1
      %s238 = smul.addr %s237, 8
      %s239 = scalar_lea.vmem %s5, %s238
      %p240 = pneg %p175
      %p241 = pneg %p172
      %p242 = scmp.lt.s32.totalorder %s18, 1
      %s243 = scalar_select %p242, %s18, 1
      %s244 = smul.addr %s243, 8
      %s245 = scalar_lea.vmem %s6, %s244
      %p246 = scmp.lt.s32.totalorder %s18, 1
      %s247 = scalar_select %p246, %s18, 1
      %s248 = smul.addr %s247, 8
      %s249 = scalar_lea.vmem %s0, %s248
      %p250 = scmp.lt.s32.totalorder %s18, 1
      %s251 = scalar_select %p250, %s18, 1
      %s252 = smul.addr %s251, 8
      %s253 = scalar_lea.vmem %s5, %s252
      %p254 = scmp.lt.s32.totalorder %s18, 1
      %s255 = scalar_select %p254, %s18, 1
      %s256 = smul.addr %s255, 8
      %s257 = scalar_lea.vmem %s6, %s256
      %v258 = vlaneseq
      %v259 = vand.u32 %v258, 127
      %vm260 = vcmp.lt.s32.totalorder %v259, 16
      %v261 = vsel %vm260, 1, 0
      %v262 = vcvt.s32.f32 %v261
      %v263 = vld [vmem:[%s1] sm:$0xff]
      %v264 = vld [vmem:[%s1 + $0x8] sm:$0xff]
      %v265 = vld [vmem:[%s2] sm:$0xff]
      %v266 = vld [vmem:[%s3] sm:$0xff]
      %vm267 = vcmask 7168
      %v268 = vsel %vm267, %v263, 0.0
      %v269 = vsel %vm267, %v264, 0.0
      %v270 = vadd.f32 %v268, %v269
      %v271 = vrcp.pop 2.0
      %v272 = vmul.f32 %v270, %v271
      %vm273 = vcmask 15368
      %v274 = vsel %vm273, %v263, 0.0
      %v275 = vsel %vm273, %v264, 0.0
      %v276 = vadd.f32 %v274, %v275
      %v277 = vsub.f32 %v263, %v272
      %v278 = vsub.f32 %v264, %v272
      %v279 = vmul.f32 %v277, %v277
      %v280 = vmul.f32 %v278, %v278
      %v281 = vsel %vm267, %v279, 0.0
      %v282 = vsel %vm267, %v280, 0.0
      %v283 = vadd.f32 %v281, %v282
      %v284 = vmul.f32 %v283, 16.0
      %286 = vrot.lane.b32.xlu0 %v284, 1
      %v287 = vpop.permute.xlu0 %286
      %v289 = vadd.f32 %v276, %v287
      %v290 = vmul.f32 %v289, 0.03125
      %v291 = vadd.f32 %v290, 1e-05
      %v292 = vrsqrt.pop %v291
      %294 = vrot.lane.b32.xlu0 %v292, 127
      %v295 = vpop.permute.xlu0 %294
      %v297 = vmul.f32 %v265, %v295
      %v298 = vmul.f32 %v272, %v297
      %v299 = vsub.f32 %v266, %v298
      %v300 = vld [vmem:[%s4] sm:$0xff]
      %s301 = scalar_lea.vmem %s4, 8
      %v302 = vld [vmem:[%s301] sm:$0xff]
      %s303 = scalar_lea.vmem %s4, 16
      %v304 = vld [vmem:[%s303] sm:$0xff]
      %v305 = vld [vmem:[%s249] sm:$0xff]
      %307 = vset.pattern.permute.xlu0 0
      %308 = vperm.xlu0 %307, %v297
      %v309 = vpop.permute.xlu0 %308
      %v311 = vmul.f32 %v305, %v309
      %313 = vset.pattern.permute.xlu0 0
      %314 = vperm.xlu0 %313, %v299
      %v315 = vpop.permute.xlu0 %314
      %v317 = vadd.f32 %v311, %v315
      %v318 = vmax.f32 %v317, 0.0
      %v319 = vmul.f32 %v318, %v262
      %vm320 = vcmp.eq.s32.totalorder %v259, 0
      %321 = vrot.lane.b32.xlu0 %v319, 1
      %v322 = vpop.permute.xlu0 %321
      %v323 = vsel %vm320, 1, 0
      %vm324 = vcmp.eq.s32.totalorder %v323, 1
      %v325 = vsel %vm324, 0.0, %v322
      %vm326 = vcmp.eq.s32.totalorder %v259, 15
      %327 = vrot.lane.b32.xlu0 %v319, 127
      %v328 = vpop.permute.xlu0 %327
      %v329 = vsel %vm326, 1, 0
      %vm330 = vcmp.eq.s32.totalorder %v329, 1
      %v331 = vsel %vm330, 0.0, %v328
      %vm332 = vcmask 64512
      %v334 = vsel %vm332, %v302, 0
      %336 = vmatprep.subr.mxu0 0.0
      %337 = vmatpush1.msra.mxu0 %v319
      %338 = vmatprep.subr.mxu0 0.0
      %339 = vmatpush1.msra.mxu0 0.0
      %340 = vmatprep.subr.mxu0 0.0
      %341 = vmatpush1.msra.mxu0 0.0
      %342 = vmatprep.subr.mxu0 0.0
      %343 = vmatpush1.msra.mxu0 0.0
      %344 = vmatprep.subr.mxu0 0.0
      %345 = vmatpush1.msra.mxu0 0.0
      %346 = vmatprep.subr.mxu0 0.0
      %347 = vmatpush1.msra.mxu0 0.0
      %348 = vmatprep.subr.mxu0 0.0
      %349 = vmatpush1.msra.mxu0 0.0
      %350 = vmatprep.subr.mxu0 0.0
      %351 = vmatpush1.msra.mxu0 0.0
      %352 = vmatprep.subr.mxu0 0.0
      %353 = vmatpush1.msra.mxu0 0.0
      %354 = vmatprep.subr.mxu0 0.0
      %355 = vmatpush1.msra.mxu0 0.0
      %356 = vmatprep.subr.mxu0 0.0
      %357 = vmatpush1.msra.mxu0 0.0
      %358 = vmatprep.subr.mxu0 0.0
      %359 = vmatpush1.msra.mxu0 0.0
      %360 = vmatprep.subr.mxu0 0.0
      %361 = vmatpush1.msra.mxu0 0.0
      %362 = vmatprep.subr.mxu0 0.0
      %363 = vmatpush1.msra.mxu0 0.0
      %364 = vmatprep.subr.mxu0 0.0
      %365 = vmatpush1.msra.mxu0 0.0
      %366 = vmatprep.subr.mxu0 0.0
      %367 = vmatpush1.msra.mxu0 0.0
      %368 = vmatprep.subr.mxu0 0.0
      %369 = vmatpush1.msra.mxu0 0.0
      %370 = vmatprep.subr.mxu0 0.0
      %371 = vmatpush1.msra.mxu0 0.0
      %372 = vmatprep.subr.mxu0 0.0
      %373 = vmatpush1.msra.mxu0 0.0
      %374 = vmatprep.subr.mxu0 0.0
      %375 = vmatpush1.msra.mxu0 0.0
      %376 = vmatprep.subr.mxu0 0.0
      %377 = vmatpush1.msra.mxu0 0.0
      %378 = vmatprep.subr.mxu0 0.0
      %379 = vmatpush1.msra.mxu0 0.0
      %380 = vmatprep.subr.mxu0 0.0
      %381 = vmatpush1.msra.mxu0 0.0
      %382 = vmatprep.subr.mxu0 0.0
      %383 = vmatpush1.msra.mxu0 0.0
      %384 = vmatprep.subr.mxu0 0.0
      %385 = vmatpush1.msra.mxu0 0.0
      %386 = vmatprep.subr.mxu0 0.0
      %387 = vmatpush1.msra.mxu0 0.0
      %388 = vmatprep.subr.mxu0 0.0
      %389 = vmatpush1.msra.mxu0 0.0
      %390 = vmatprep.subr.mxu0 0.0
      %391 = vmatpush1.msra.mxu0 0.0
      %392 = vmatprep.subr.mxu0 0.0
      %393 = vmatpush1.msra.mxu0 0.0
      %394 = vmatprep.subr.mxu0 0.0
      %395 = vmatpush1.msra.mxu0 0.0
      %396 = vmatprep.subr.mxu0 0.0
      %397 = vmatpush1.msra.mxu0 0.0
      %398 = vmatprep.subr.mxu0 0.0
      %399 = vmatpush1.msra.mxu0 0.0
      %400 = vmatprep.mubr.f32.mxu0 0.0
      %401 = vmatmul.mubr.f32.gmra.mrb[0].mxu0 %v334
      %v402 = vpop.f32.mrb[0].mxu0
      %v403 = vadd.f32 0.0, %v402
      %v404 = vpop.f32.mrb[0].mxu0
      %405 = vdwg.mxu0
      %v407 = vsel %vm332, %v300, 0
      %409 = vmatprep.subr.mxu0 0.0
      %410 = vmatpush1.msra.mxu0 %v325
      %411 = vmatprep.subr.mxu0 0.0
      %412 = vmatpush1.msra.mxu0 0.0
      %413 = vmatprep.subr.mxu0 0.0
      %414 = vmatpush1.msra.mxu0 0.0
      %415 = vmatprep.subr.mxu0 0.0
      %416 = vmatpush1.msra.mxu0 0.0
      %417 = vmatprep.subr.mxu0 0.0
      %418 = vmatpush1.msra.mxu0 0.0
      %419 = vmatprep.subr.mxu0 0.0
      %420 = vmatpush1.msra.mxu0 0.0
      %421 = vmatprep.subr.mxu0 0.0
      %422 = vmatpush1.msra.mxu0 0.0
      %423 = vmatprep.subr.mxu0 0.0
      %424 = vmatpush1.msra.mxu0 0.0
      %425 = vmatprep.subr.mxu0 0.0
      %426 = vmatpush1.msra.mxu0 0.0
      %427 = vmatprep.subr.mxu0 0.0
      %428 = vmatpush1.msra.mxu0 0.0
      %429 = vmatprep.subr.mxu0 0.0
      %430 = vmatpush1.msra.mxu0 0.0
      %431 = vmatprep.subr.mxu0 0.0
      %432 = vmatpush1.msra.mxu0 0.0
      %433 = vmatprep.subr.mxu0 0.0
      %434 = vmatpush1.msra.mxu0 0.0
      %435 = vmatprep.subr.mxu0 0.0
      %436 = vmatpush1.msra.mxu0 0.0
      %437 = vmatprep.subr.mxu0 0.0
      %438 = vmatpush1.msra.mxu0 0.0
      %439 = vmatprep.subr.mxu0 0.0
      %440 = vmatpush1.msra.mxu0 0.0
      %441 = vmatprep.subr.mxu0 0.0
      %442 = vmatpush1.msra.mxu0 0.0
      %443 = vmatprep.subr.mxu0 0.0
      %444 = vmatpush1.msra.mxu0 0.0
      %445 = vmatprep.subr.mxu0 0.0
      %446 = vmatpush1.msra.mxu0 0.0
      %447 = vmatprep.subr.mxu0 0.0
      %448 = vmatpush1.msra.mxu0 0.0
      %449 = vmatprep.subr.mxu0 0.0
      %450 = vmatpush1.msra.mxu0 0.0
      %451 = vmatprep.subr.mxu0 0.0
      %452 = vmatpush1.msra.mxu0 0.0
      %453 = vmatprep.subr.mxu0 0.0
      %454 = vmatpush1.msra.mxu0 0.0
      %455 = vmatprep.subr.mxu0 0.0
      %456 = vmatpush1.msra.mxu0 0.0
      %457 = vmatprep.subr.mxu0 0.0
      %458 = vmatpush1.msra.mxu0 0.0
      %459 = vmatprep.subr.mxu0 0.0
      %460 = vmatpush1.msra.mxu0 0.0
      %461 = vmatprep.subr.mxu0 0.0
      %462 = vmatpush1.msra.mxu0 0.0
      %463 = vmatprep.subr.mxu0 0.0
      %464 = vmatpush1.msra.mxu0 0.0
      %465 = vmatprep.subr.mxu0 0.0
      %466 = vmatpush1.msra.mxu0 0.0
      %467 = vmatprep.subr.mxu0 0.0
      %468 = vmatpush1.msra.mxu0 0.0
      %469 = vmatprep.subr.mxu0 0.0
      %470 = vmatpush1.msra.mxu0 0.0
      %471 = vmatprep.subr.mxu0 0.0
      %472 = vmatpush1.msra.mxu0 0.0
      %473 = vmatprep.mubr.f32.mxu0 0.0
      %474 = vmatmul.mubr.f32.gmra.mrb[0].mxu0 %v407
      %v475 = vpop.f32.mrb[0].mxu0
      %v476 = vadd.f32 %v403, %v475
      %v477 = vpop.f32.mrb[0].mxu0
      %478 = vdwg.mxu0
      %v480 = vsel %vm332, %v304, 0
      %482 = vmatprep.subr.mxu0 0.0
      %483 = vmatpush1.msra.mxu0 %v331
      %484 = vmatprep.subr.mxu0 0.0
      %485 = vmatpush1.msra.mxu0 0.0
      %486 = vmatprep.subr.mxu0 0.0
      %487 = vmatpush1.msra.mxu0 0.0
      %488 = vmatprep.subr.mxu0 0.0
      %489 = vmatpush1.msra.mxu0 0.0
      %490 = vmatprep.subr.mxu0 0.0
      %491 = vmatpush1.msra.mxu0 0.0
      %492 = vmatprep.subr.mxu0 0.0
      %493 = vmatpush1.msra.mxu0 0.0
      %494 = vmatprep.subr.mxu0 0.0
      %495 = vmatpush1.msra.mxu0 0.0
      %496 = vmatprep.subr.mxu0 0.0
      %497 = vmatpush1.msra.mxu0 0.0
      %498 = vmatprep.subr.mxu0 0.0
      %499 = vmatpush1.msra.mxu0 0.0
      %500 = vmatprep.subr.mxu0 0.0
      %501 = vmatpush1.msra.mxu0 0.0
      %502 = vmatprep.subr.mxu0 0.0
      %503 = vmatpush1.msra.mxu0 0.0
      %504 = vmatprep.subr.mxu0 0.0
      %505 = vmatpush1.msra.mxu0 0.0
      %506 = vmatprep.subr.mxu0 0.0
      %507 = vmatpush1.msra.mxu0 0.0
      %508 = vmatprep.subr.mxu0 0.0
      %509 = vmatpush1.msra.mxu0 0.0
      %510 = vmatprep.subr.mxu0 0.0
      %511 = vmatpush1.msra.mxu0 0.0
      %512 = vmatprep.subr.mxu0 0.0
      %513 = vmatpush1.msra.mxu0 0.0
      %514 = vmatprep.subr.mxu0 0.0
      %515 = vmatpush1.msra.mxu0 0.0
      %516 = vmatprep.subr.mxu0 0.0
      %517 = vmatpush1.msra.mxu0 0.0
      %518 = vmatprep.subr.mxu0 0.0
      %519 = vmatpush1.msra.mxu0 0.0
      %520 = vmatprep.subr.mxu0 0.0
      %521 = vmatpush1.msra.mxu0 0.0
      %522 = vmatprep.subr.mxu0 0.0
      %523 = vmatpush1.msra.mxu0 0.0
      %524 = vmatprep.subr.mxu0 0.0
      %525 = vmatpush1.msra.mxu0 0.0
      %526 = vmatprep.subr.mxu0 0.0
      %527 = vmatpush1.msra.mxu0 0.0
      %528 = vmatprep.subr.mxu0 0.0
      %529 = vmatpush1.msra.mxu0 0.0
      %530 = vmatprep.subr.mxu0 0.0
      %531 = vmatpush1.msra.mxu0 0.0
      %532 = vmatprep.subr.mxu0 0.0
      %533 = vmatpush1.msra.mxu0 0.0
      %534 = vmatprep.subr.mxu0 0.0
      %535 = vmatpush1.msra.mxu0 0.0
      %536 = vmatprep.subr.mxu0 0.0
      %537 = vmatpush1.msra.mxu0 0.0
      %538 = vmatprep.subr.mxu0 0.0
      %539 = vmatpush1.msra.mxu0 0.0
      %540 = vmatprep.subr.mxu0 0.0
      %541 = vmatpush1.msra.mxu0 0.0
      %542 = vmatprep.subr.mxu0 0.0
      %543 = vmatpush1.msra.mxu0 0.0
      %544 = vmatprep.subr.mxu0 0.0
      %545 = vmatpush1.msra.mxu0 0.0
      %546 = vmatprep.mubr.f32.mxu0 0.0
      %547 = vmatmul.mubr.f32.gmra.mrb[0].mxu0 %v480
      %v548 = vpop.f32.mrb[0].mxu0
      %v549 = vadd.f32 0.0, %v548
      %v550 = vpop.f32.mrb[0].mxu0
      %551 = vdwg.mxu0
      %v552 = vadd.f32 %v476, %v549
      %v553 = vmul.f32 %v552, %v262
      %554 = vadd.xlane.f32.xlu0 %v553
      %v555 = vpop.xlane.xlu0 %554
      %v556 = vmul.f32 %v555, 0.0625
      %v557 = vsub.f32 %v553, %v556
      %v558 = vmul.f32 %v557, %v557
      %v559 = vmul.f32 %v262, %v558
      %560 = vadd.xlane.f32.xlu0 %v559
      %v561 = vpop.xlane.xlu0 %560
      %v562 = vsel %vm267, %v556, %v561
      %vm563 = vcmask 15360
      %564 = vst.msk [vmem:[%s257] sm:$0xff] %vm563, %v562
      %565 = vst [vmem:[%s253] sm:$0xff] %v553
      %p566 = scmp.lt.s32.totalorder %s18, 1
      %s567 = scalar_select %p566, %s18, 1
      %s568 = smul.addr %s567, 8
      %s569 = scalar_lea.vmem %s5, %s568
      %p570 = scmp.lt.s32.totalorder %s18, 1
      %s571 = scalar_select %p570, %s18, 1
      %s572 = smul.addr %s571, 8
      %s573 = scalar_lea.vmem %s6, %s572
      // Predicated region
      $region41: #{bottleneck_forward.5} parent=39 // pred_check
        %p574 = pneg %p146
      $region42: #{bottleneck_forward.5} parent=39 // pred_check_branch
        %576 = sbr.rel (%p574) target = $region44
      $region43: #{bottleneck_forward.5} parent=39 // pred_region
        _
      $region44: #{bottleneck_forward.5} parent=39 // pred_fallthru
        _
      // Predicated region
      $region45: #{bottleneck_forward.5} parent=39 // pred_check
        %p577 = pneg %p172
      $region46: #{bottleneck_forward.5} parent=39 // pred_check_branch
        %579 = sbr.rel (%p577) target = $region48
      $region47: #{bottleneck_forward.5} parent=39 // pred_region
        _
      $region48: #{bottleneck_forward.5} parent=39 // pred_fallthru
        _
    $region40: #{bottleneck_forward.5} parent=5 // pred_fallthru
      _
    %p580 = scmp.le.s32.totalorder 2, %s13
    // Predicated region
    $region49: #{bottleneck_forward.5} parent=5 // pred_check
      %p581 = pneg %p580
    $region50: #{bottleneck_forward.5} parent=5 // pred_check_branch
      %583 = sbr.rel (%p581) target = $region52
    $region51: #{bottleneck_forward.5} parent=5 // pred_region
      %s584 = ssub.s32 %s13, 2
      // Predicated region
      $region53: #{bottleneck_forward.5} parent=51 // pred_check
        %p585 = pneg %p152
      $region54: #{bottleneck_forward.5} parent=51 // pred_check_branch
        %587 = sbr.rel (%p585) target = $region56
      $region55: #{bottleneck_forward.5} parent=51 // pred_region
        %p588 = scmp.lt.s32.totalorder %s19, 1
        %s589 = scalar_select %p588, %s19, 1
        %s590 = smul.addr %s589, 8
        %s591 = scalar_lea.vmem %s5, %s590
      $region56: #{bottleneck_forward.5} parent=51 // pred_fallthru
        _
      // Predicated region
      $region57: #{bottleneck_forward.5} parent=51 // pred_check
        %p592 = pneg %p178
      $region58: #{bottleneck_forward.5} parent=51 // pred_check_branch
        %594 = sbr.rel (%p592) target = $region60
      $region59: #{bottleneck_forward.5} parent=51 // pred_region
        %p595 = scmp.lt.s32.totalorder %s19, 1
        %s596 = scalar_select %p595, %s19, 1
        %s597 = smul.addr %s596, 8
        %s598 = scalar_lea.vmem %s6, %s597
      $region60: #{bottleneck_forward.5} parent=51 // pred_fallthru
        _
    $region52: #{bottleneck_forward.5} parent=5 // pred_fallthru
      _
  $region6: #{bottleneck_forward.5} parent=0 // loop_footer
    %s17 = sadd.s32 1, %s13
  $region7: #{bottleneck_forward.5} parent=0 // loop_footer_branch
    %12 = sbr.rel target = $region3
  $region8: #{bottleneck_forward.5} parent=0 // loop_exit
    _

</llo_original>
